<compile_context>
chip_gen: v7x
topology: tpu7x:2x2x1
jax: 0.10.0
libtpu: 0.0.40
codegen_flags: <defaults>
</compile_context>

<pallas_src>
import functools

import jax
import jax.numpy as jnp
from jax import lax
from jax.experimental import pallas as pl
from jax.experimental.pallas import tpu as pltpu

BN_EPS = 1e-5
LRELU_SLOPE = 0.2


def _conv_bn_stats_kernel(s_ref, w_ref, mask_ref, y_ref, sum_ref, ssq_ref, *,
                          k, wo):
    """One image per grid step: fused conv (16 taps) + streamed BN statistics.

    s_ref   : (4, C, Lpad)  bf16  parity sub-images, spatial flattened
    w_ref   : (k*k, O, C)   bf16  per-tap weight matrices
    mask_ref: (1, Mdil)     f32   1.0 on real output columns, 0.0 on junk columns
    y_ref   : (O, Mdil)     bf16  conv output (dilated row layout) for this image
    sum_ref : (O, 1)        f32   per-image partial sum
    ssq_ref : (O, 1)        f32   per-image partial sum of squares
    """
    c_out, mdil = y_ref.shape
    acc = jnp.zeros((c_out, mdil), dtype=jnp.float32)
    for kh in range(k):
        qh, ph = kh // 2, kh % 2
        for kw in range(k):
            qw, pw = kw // 2, kw % 2
            # Tap (kh, kw) of the stride-2 conv == shift (qh, qw) of parity
            # sub-image (ph, pw); in the flattened layout that is one static
            # contiguous lane-offset slice (no strided access needed).
            shift = qh * (wo + 1) + qw
            rhs = s_ref[ph * 2 + pw, :, pl.ds(shift, mdil)]          # (C, Mdil)
            acc = acc + jnp.dot(w_ref[kh * k + kw], rhs,
                                preferred_element_type=jnp.float32)  # (O, Mdil)
    # Streamed BN statistics in f32; dilation junk columns masked out.
    yv = acc * mask_ref[...]
    sum_ref[...] = jnp.sum(yv, axis=1, keepdims=True)
    ssq_ref[...] = jnp.sum(yv * yv, axis=1, keepdims=True)
    y_ref[...] = acc.astype(y_ref.dtype)


def conv_block(x, w, b, gamma, beta, *, kernel_size=4, stride=2, padding=1):
    """ConvBlock forward.  x: (N, C, H, W) f32 -> (N, O, Ho, Wo) f32.

    The conv bias `b` is accepted for API parity but unused: a bias feeding a
    training-mode BatchNorm cancels exactly (the batch mean absorbs it).
    """
    assert kernel_size == 4 and stride == 2 and padding == 1, (
        "fused parity decomposition is specialized to k=4, s=2, p=1")
    del b
    n, c_in, h, w_sp = x.shape
    c_out = w.shape[0]
    k = kernel_size

    ho = (h + 2 * padding - k) // stride + 1
    wo = (w_sp + 2 * padding - k) // stride + 1
    mdil = ho * (wo + 1)          # dilated row layout: one junk column per row
    lflat = (ho + 1) * (wo + 1)   # flattened parity sub-image length
    lpad = mdil + wo + 2          # = lflat + 1; covers the largest tap shift
    m = n * ho * wo               # number of real output positions

    # ---- Prologue (XLA, ~1.1x input elems): LeakyReLU once, pad, parity split.
    xa = jnp.where(x > 0, x, LRELU_SLOPE * x)
    xp = jnp.pad(xa, ((0, 0), (0, 0), (padding, padding), (padding, padding)))
    subs = jnp.stack(
        [xp[:, :, ph:ph + stride * (ho + 1):stride,
             pw:pw + stride * (wo + 1):stride]
         for ph in range(stride) for pw in range(stride)],
        axis=1)                                        # (N, 4, C, Ho+1, Wo+1)
    subs = subs.reshape(n, 4, c_in, lflat)
    subs = jnp.pad(subs, ((0, 0), (0, 0), (0, 0), (0, lpad - lflat)))
    subs = subs.astype(jnp.bfloat16)

    # Per-tap weight matrices (tap = kh*k + kw) and the junk-column mask.
    w_taps = jnp.transpose(w, (2, 3, 0, 1)).reshape(k * k, c_out, c_in)
    w_taps = w_taps.astype(jnp.bfloat16)
    mask = (jnp.arange(mdil) % (wo + 1) != wo).astype(jnp.float32).reshape(1, mdil)

    # ---- VMEM budget derived from the actual per-step block bytes.
    block_bytes = (4 * c_in * lpad * 2            # sub-image block (bf16)
                   + k * k * c_out * c_in * 2     # weights
                   + mdil * 4                     # mask
                   + c_out * mdil * (2 + 4)       # y block (bf16) + f32 accumulator
                   + 2 * c_out * 4)               # stats partials
    vmem_limit = int(min(max(32 * 1024 * 1024, 4 * block_bytes),
                         64 * 1024 * 1024))

    flops = 2 * n * mdil * k * k * c_in * c_out
    bytes_accessed = (subs.size * 2 + w_taps.size * 2 + mask.size * 4
                      + n * c_out * mdil * 2 + 2 * n * c_out * 4)

    y_dil, psum, pssq = pl.pallas_call(
        functools.partial(_conv_bn_stats_kernel, k=k, wo=wo),
        grid=(n,),
        in_specs=[
            pl.BlockSpec((None, 4, c_in, lpad), lambda i: (i, 0, 0, 0)),
            pl.BlockSpec((k * k, c_out, c_in), lambda i: (0, 0, 0)),
            pl.BlockSpec((1, mdil), lambda i: (0, 0)),
        ],
        out_specs=[
            pl.BlockSpec((None, c_out, mdil), lambda i: (i, 0, 0)),
            pl.BlockSpec((None, c_out, 1), lambda i: (i, 0, 0)),
            pl.BlockSpec((None, c_out, 1), lambda i: (i, 0, 0)),
        ],
        out_shape=[
            jax.ShapeDtypeStruct((n, c_out, mdil), jnp.bfloat16),
            jax.ShapeDtypeStruct((n, c_out, 1), jnp.float32),
            jax.ShapeDtypeStruct((n, c_out, 1), jnp.float32),
        ],
        compiler_params=pltpu.CompilerParams(
            dimension_semantics=("parallel",),   # per-image partials -> megacore-safe
            vmem_limit_bytes=vmem_limit),
        cost_estimate=pl.CostEstimate(flops=flops, transcendentals=0,
                                      bytes_accessed=bytes_accessed),
    )(subs, w_taps, mask)

    # ---- Tiny glue: reduce per-image partials, fold BN into scale/shift.
    s_sum = jnp.sum(psum, axis=0)                  # (O, 1)
    s_sq = jnp.sum(pssq, axis=0)                   # (O, 1)
    mean = s_sum / m
    var = s_sq / m - mean * mean                   # biased variance (training BN)
    rstd = lax.rsqrt(var + BN_EPS)
    scale = gamma.reshape(c_out, 1) * rstd
    shift = beta.reshape(c_out, 1) - mean * scale

    # ---- Epilogue: BN apply fused by XLA with the junk-column slice.  y_dil is
    # already in NCHW block order, so no transpose / second kernel is needed.
    y4 = y_dil.reshape(n, c_out, ho, wo + 1)[:, :, :, :wo].astype(jnp.float32)
    return y4 * scale.reshape(1, c_out, 1, 1) + shift.reshape(1, c_out, 1, 1)


def conv_block_ref(x, w, b, gamma, beta):
    """Pure-JAX f32 reference (matches the PyTorch module in training mode)."""
    xa = jnp.where(x > 0, x, LRELU_SLOPE * x)
    y = lax.conv_general_dilated(
        xa, w, window_strides=(2, 2), padding=((1, 1), (1, 1)),
        dimension_numbers=("NCHW", "OIHW", "NCHW"))
    y = y + b[None, :, None, None]
    mean = jnp.mean(y, axis=(0, 2, 3), keepdims=True)
    var = jnp.mean((y - mean) ** 2, axis=(0, 2, 3), keepdims=True)
    y_hat = (y - mean) * lax.rsqrt(var + BN_EPS)
    return y_hat * gamma[None, :, None, None] + beta[None, :, None, None]


def _run_case(key, n, c_in, h, w_sp, c_out, k=4):
    kx, kw_, kb, kg, kbt = jax.random.split(key, 5)
    x = jax.random.normal(kx, (n, c_in, h, w_sp), dtype=jnp.float32)
    w = 0.1 * jax.random.normal(kw_, (c_out, c_in, k, k), dtype=jnp.float32)
    b = 0.1 * jax.random.normal(kb, (c_out,), dtype=jnp.float32)
    gamma = 1.0 + 0.1 * jax.random.normal(kg, (c_out,), dtype=jnp.float32)
    beta = 0.1 * jax.random.normal(kbt, (c_out,), dtype=jnp.float32)

    out = jax.block_until_ready(conv_block(x, w, b, gamma, beta))
    ref = conv_block_ref(x, w, b, gamma, beta)
    assert out.shape == ref.shape, (out.shape, ref.shape)
    err = float(jnp.max(jnp.abs(out - ref)))
    # bf16 MXU operands + bf16 y intermediate vs the f32 reference.
    assert err < 5e-2, err
    return err


if __name__ == "__main__":
    key = jax.random.PRNGKey(0)
    k0, k1, k2 = jax.random.split(key, 3)
    # Primary small case: ConvBlock(4, 8), x = (2, 4, 16, 16).
    _run_case(k0, 2, 4, 16, 16, 8)
    # Larger spatial case: Mdil = 272 (> 128 lanes), cross-image stat reduction.
    _run_case(k1, 2, 4, 32, 32, 8)
    # Odd spatial / single-image grid: exercises junk-column masking at Wo = 5.
    _run_case(k2, 1, 4, 10, 10, 8)
    print("KERNEL_OK")
</pallas_src>

<mosaic_0001>
module attributes {stable_mosaic.version = 11 : i64} {
  func.func @_conv_bn_stats_kernel(%arg0: i32, %arg1: memref<1x4x4x82xbf16, #tpu.memory_space<vmem>>, %arg2: memref<16x8x4xbf16, #tpu.memory_space<vmem>>, %arg3: memref<1x72xf32, #tpu.memory_space<vmem>>, %arg4: memref<1x8x72xbf16, #tpu.memory_space<vmem>>, %arg5: memref<1x8x1xf32, #tpu.memory_space<vmem>>, %arg6: memref<1x8x1xf32, #tpu.memory_space<vmem>>) attributes {dimension_semantics = [#tpu.dimension_semantics<parallel>], iteration_bounds = array<i64: 2>, scalar_prefetch = 0 : i64, scratch_operands = 0 : i64, tpu.core_type = #tpu.core_type<tc>, window_params = [{transform_indices = @transform_0, window_bounds = array<i64: 1, 4, 4, 82>}, {pipeline_mode = #tpu.pipeline_mode<synchronous>, transform_indices = @transform_1, window_bounds = array<i64: 16, 8, 4>}, {pipeline_mode = #tpu.pipeline_mode<synchronous>, transform_indices = @transform_2, window_bounds = array<i64: 1, 72>}, {transform_indices = @transform_3, window_bounds = array<i64: 1, 8, 72>}, {transform_indices = @transform_4, window_bounds = array<i64: 1, 8, 1>}, {transform_indices = @transform_5, window_bounds = array<i64: 1, 8, 1>}]} {
    %cst = arith.constant 0.000000e+00 : f32
    %0 = vector.broadcast %cst : f32 to vector<8x72xf32>
    %c0 = arith.constant 0 : index
    %c0_0 = arith.constant 0 : index
    %c0_1 = arith.constant 0 : index
    %c0_2 = arith.constant 0 : index
    %1 = vector.load %arg1[%c0, %c0_0, %c0_1, %c0_2] : memref<1x4x4x82xbf16, #tpu.memory_space<vmem>>, vector<1x1x4x72xbf16>
    %2 = vector.shape_cast %1 : vector<1x1x4x72xbf16> to vector<4x72xbf16>
    %c0_3 = arith.constant 0 : index
    %c0_4 = arith.constant 0 : index
    %c0_5 = arith.constant 0 : index
    %3 = vector.load %arg2[%c0_3, %c0_4, %c0_5] : memref<16x8x4xbf16, #tpu.memory_space<vmem>>, vector<1x8x4xbf16>
    %4 = vector.shape_cast %3 : vector<1x8x4xbf16> to vector<8x4xbf16>
    %cst_6 = arith.constant dense<0.000000e+00> : vector<8x72xf32>
    %5 = tpu.matmul %4, %2, %cst_6 {dimension_numbers = #tpu.dot_dimension_numbers<[1], [0], [0], [1], [0, 0, 1, 1], [], []>} : vector<8x4xbf16>, vector<4x72xbf16>, vector<8x72xf32> -> vector<8x72xf32>
    %6 = arith.addf %0, %5 : vector<8x72xf32>
    %c0_7 = arith.constant 0 : index
    %c1 = arith.constant 1 : index
    %c0_8 = arith.constant 0 : index
    %c0_9 = arith.constant 0 : index
    %7 = vector.load %arg1[%c0_7, %c1, %c0_8, %c0_9] : memref<1x4x4x82xbf16, #tpu.memory_space<vmem>>, vector<1x1x4x72xbf16>
    %8 = vector.shape_cast %7 : vector<1x1x4x72xbf16> to vector<4x72xbf16>
    %c1_10 = arith.constant 1 : index
    %c0_11 = arith.constant 0 : index
    %c0_12 = arith.constant 0 : index
    %9 = vector.load %arg2[%c1_10, %c0_11, %c0_12] : memref<16x8x4xbf16, #tpu.memory_space<vmem>>, vector<1x8x4xbf16>
    %10 = vector.shape_cast %9 : vector<1x8x4xbf16> to vector<8x4xbf16>
    %cst_13 = arith.constant dense<0.000000e+00> : vector<8x72xf32>
    %11 = tpu.matmul %10, %8, %cst_13 {dimension_numbers = #tpu.dot_dimension_numbers<[1], [0], [0], [1], [0, 0, 1, 1], [], []>} : vector<8x4xbf16>, vector<4x72xbf16>, vector<8x72xf32> -> vector<8x72xf32>
    %12 = arith.addf %6, %11 : vector<8x72xf32>
    %c0_14 = arith.constant 0 : index
    %c0_15 = arith.constant 0 : index
    %c0_16 = arith.constant 0 : index
    %c1_17 = arith.constant 1 : index
    %13 = vector.load %arg1[%c0_14, %c0_15, %c0_16, %c1_17] : memref<1x4x4x82xbf16, #tpu.memory_space<vmem>>, vector<1x1x4x72xbf16>
    %14 = vector.shape_cast %13 : vector<1x1x4x72xbf16> to vector<4x72xbf16>
    %c2 = arith.constant 2 : index
    %c0_18 = arith.constant 0 : index
    %c0_19 = arith.constant 0 : index
    %15 = vector.load %arg2[%c2, %c0_18, %c0_19] : memref<16x8x4xbf16, #tpu.memory_space<vmem>>, vector<1x8x4xbf16>
    %16 = vector.shape_cast %15 : vector<1x8x4xbf16> to vector<8x4xbf16>
    %cst_20 = arith.constant dense<0.000000e+00> : vector<8x72xf32>
    %17 = tpu.matmul %16, %14, %cst_20 {dimension_numbers = #tpu.dot_dimension_numbers<[1], [0], [0], [1], [0, 0, 1, 1], [], []>} : vector<8x4xbf16>, vector<4x72xbf16>, vector<8x72xf32> -> vector<8x72xf32>
    %18 = arith.addf %12, %17 : vector<8x72xf32>
    %c0_21 = arith.constant 0 : index
    %c1_22 = arith.constant 1 : index
    %c0_23 = arith.constant 0 : index
    %c1_24 = arith.constant 1 : index
    %19 = vector.load %arg1[%c0_21, %c1_22, %c0_23, %c1_24] : memref<1x4x4x82xbf16, #tpu.memory_space<vmem>>, vector<1x1x4x72xbf16>
    %20 = vector.shape_cast %19 : vector<1x1x4x72xbf16> to vector<4x72xbf16>
    %c3 = arith.constant 3 : index
    %c0_25 = arith.constant 0 : index
    %c0_26 = arith.constant 0 : index
    %21 = vector.load %arg2[%c3, %c0_25, %c0_26] : memref<16x8x4xbf16, #tpu.memory_space<vmem>>, vector<1x8x4xbf16>
    %22 = vector.shape_cast %21 : vector<1x8x4xbf16> to vector<8x4xbf16>
    %cst_27 = arith.constant dense<0.000000e+00> : vector<8x72xf32>
    %23 = tpu.matmul %22, %20, %cst_27 {dimension_numbers = #tpu.dot_dimension_numbers<[1], [0], [0], [1], [0, 0, 1, 1], [], []>} : vector<8x4xbf16>, vector<4x72xbf16>, vector<8x72xf32> -> vector<8x72xf32>
    %24 = arith.addf %18, %23 : vector<8x72xf32>
    %c0_28 = arith.constant 0 : index
    %c2_29 = arith.constant 2 : index
    %c0_30 = arith.constant 0 : index
    %c0_31 = arith.constant 0 : index
    %25 = vector.load %arg1[%c0_28, %c2_29, %c0_30, %c0_31] : memref<1x4x4x82xbf16, #tpu.memory_space<vmem>>, vector<1x1x4x72xbf16>
    %26 = vector.shape_cast %25 : vector<1x1x4x72xbf16> to vector<4x72xbf16>
    %c4 = arith.constant 4 : index
    %c0_32 = arith.constant 0 : index
    %c0_33 = arith.constant 0 : index
    %27 = vector.load %arg2[%c4, %c0_32, %c0_33] : memref<16x8x4xbf16, #tpu.memory_space<vmem>>, vector<1x8x4xbf16>
    %28 = vector.shape_cast %27 : vector<1x8x4xbf16> to vector<8x4xbf16>
    %cst_34 = arith.constant dense<0.000000e+00> : vector<8x72xf32>
    %29 = tpu.matmul %28, %26, %cst_34 {dimension_numbers = #tpu.dot_dimension_numbers<[1], [0], [0], [1], [0, 0, 1, 1], [], []>} : vector<8x4xbf16>, vector<4x72xbf16>, vector<8x72xf32> -> vector<8x72xf32>
    %30 = arith.addf %24, %29 : vector<8x72xf32>
    %c0_35 = arith.constant 0 : index
    %c3_36 = arith.constant 3 : index
    %c0_37 = arith.constant 0 : index
    %c0_38 = arith.constant 0 : index
    %31 = vector.load %arg1[%c0_35, %c3_36, %c0_37, %c0_38] : memref<1x4x4x82xbf16, #tpu.memory_space<vmem>>, vector<1x1x4x72xbf16>
    %32 = vector.shape_cast %31 : vector<1x1x4x72xbf16> to vector<4x72xbf16>
    %c5 = arith.constant 5 : index
    %c0_39 = arith.constant 0 : index
    %c0_40 = arith.constant 0 : index
    %33 = vector.load %arg2[%c5, %c0_39, %c0_40] : memref<16x8x4xbf16, #tpu.memory_space<vmem>>, vector<1x8x4xbf16>
    %34 = vector.shape_cast %33 : vector<1x8x4xbf16> to vector<8x4xbf16>
    %cst_41 = arith.constant dense<0.000000e+00> : vector<8x72xf32>
    %35 = tpu.matmul %34, %32, %cst_41 {dimension_numbers = #tpu.dot_dimension_numbers<[1], [0], [0], [1], [0, 0, 1, 1], [], []>} : vector<8x4xbf16>, vector<4x72xbf16>, vector<8x72xf32> -> vector<8x72xf32>
    %36 = arith.addf %30, %35 : vector<8x72xf32>
    %c0_42 = arith.constant 0 : index
    %c2_43 = arith.constant 2 : index
    %c0_44 = arith.constant 0 : index
    %c1_45 = arith.constant 1 : index
    %37 = vector.load %arg1[%c0_42, %c2_43, %c0_44, %c1_45] : memref<1x4x4x82xbf16, #tpu.memory_space<vmem>>, vector<1x1x4x72xbf16>
    %38 = vector.shape_cast %37 : vector<1x1x4x72xbf16> to vector<4x72xbf16>
    %c6 = arith.constant 6 : index
    %c0_46 = arith.constant 0 : index
    %c0_47 = arith.constant 0 : index
    %39 = vector.load %arg2[%c6, %c0_46, %c0_47] : memref<16x8x4xbf16, #tpu.memory_space<vmem>>, vector<1x8x4xbf16>
    %40 = vector.shape_cast %39 : vector<1x8x4xbf16> to vector<8x4xbf16>
    %cst_48 = arith.constant dense<0.000000e+00> : vector<8x72xf32>
    %41 = tpu.matmul %40, %38, %cst_48 {dimension_numbers = #tpu.dot_dimension_numbers<[1], [0], [0], [1], [0, 0, 1, 1], [], []>} : vector<8x4xbf16>, vector<4x72xbf16>, vector<8x72xf32> -> vector<8x72xf32>
    %42 = arith.addf %36, %41 : vector<8x72xf32>
    %c0_49 = arith.constant 0 : index
    %c3_50 = arith.constant 3 : index
    %c0_51 = arith.constant 0 : index
    %c1_52 = arith.constant 1 : index
    %43 = vector.load %arg1[%c0_49, %c3_50, %c0_51, %c1_52] : memref<1x4x4x82xbf16, #tpu.memory_space<vmem>>, vector<1x1x4x72xbf16>
    %44 = vector.shape_cast %43 : vector<1x1x4x72xbf16> to vector<4x72xbf16>
    %c7 = arith.constant 7 : index
    %c0_53 = arith.constant 0 : index
    %c0_54 = arith.constant 0 : index
    %45 = vector.load %arg2[%c7, %c0_53, %c0_54] : memref<16x8x4xbf16, #tpu.memory_space<vmem>>, vector<1x8x4xbf16>
    %46 = vector.shape_cast %45 : vector<1x8x4xbf16> to vector<8x4xbf16>
    %cst_55 = arith.constant dense<0.000000e+00> : vector<8x72xf32>
    %47 = tpu.matmul %46, %44, %cst_55 {dimension_numbers = #tpu.dot_dimension_numbers<[1], [0], [0], [1], [0, 0, 1, 1], [], []>} : vector<8x4xbf16>, vector<4x72xbf16>, vector<8x72xf32> -> vector<8x72xf32>
    %48 = arith.addf %42, %47 : vector<8x72xf32>
    %c0_56 = arith.constant 0 : index
    %c0_57 = arith.constant 0 : index
    %c0_58 = arith.constant 0 : index
    %c9 = arith.constant 9 : index
    %49 = vector.load %arg1[%c0_56, %c0_57, %c0_58, %c9] : memref<1x4x4x82xbf16, #tpu.memory_space<vmem>>, vector<1x1x4x72xbf16>
    %50 = vector.shape_cast %49 : vector<1x1x4x72xbf16> to vector<4x72xbf16>
    %c8 = arith.constant 8 : index
    %c0_59 = arith.constant 0 : index
    %c0_60 = arith.constant 0 : index
    %51 = vector.load %arg2[%c8, %c0_59, %c0_60] : memref<16x8x4xbf16, #tpu.memory_space<vmem>>, vector<1x8x4xbf16>
    %52 = vector.shape_cast %51 : vector<1x8x4xbf16> to vector<8x4xbf16>
    %cst_61 = arith.constant dense<0.000000e+00> : vector<8x72xf32>
    %53 = tpu.matmul %52, %50, %cst_61 {dimension_numbers = #tpu.dot_dimension_numbers<[1], [0], [0], [1], [0, 0, 1, 1], [], []>} : vector<8x4xbf16>, vector<4x72xbf16>, vector<8x72xf32> -> vector<8x72xf32>
    %54 = arith.addf %48, %53 : vector<8x72xf32>
    %c0_62 = arith.constant 0 : index
    %c1_63 = arith.constant 1 : index
    %c0_64 = arith.constant 0 : index
    %c9_65 = arith.constant 9 : index
    %55 = vector.load %arg1[%c0_62, %c1_63, %c0_64, %c9_65] : memref<1x4x4x82xbf16, #tpu.memory_space<vmem>>, vector<1x1x4x72xbf16>
    %56 = vector.shape_cast %55 : vector<1x1x4x72xbf16> to vector<4x72xbf16>
    %c9_66 = arith.constant 9 : index
    %c0_67 = arith.constant 0 : index
    %c0_68 = arith.constant 0 : index
    %57 = vector.load %arg2[%c9_66, %c0_67, %c0_68] : memref<16x8x4xbf16, #tpu.memory_space<vmem>>, vector<1x8x4xbf16>
    %58 = vector.shape_cast %57 : vector<1x8x4xbf16> to vector<8x4xbf16>
    %cst_69 = arith.constant dense<0.000000e+00> : vector<8x72xf32>
    %59 = tpu.matmul %58, %56, %cst_69 {dimension_numbers = #tpu.dot_dimension_numbers<[1], [0], [0], [1], [0, 0, 1, 1], [], []>} : vector<8x4xbf16>, vector<4x72xbf16>, vector<8x72xf32> -> vector<8x72xf32>
    %60 = arith.addf %54, %59 : vector<8x72xf32>
    %c0_70 = arith.constant 0 : index
    %c0_71 = arith.constant 0 : index
    %c0_72 = arith.constant 0 : index
    %c10 = arith.constant 10 : index
    %61 = vector.load %arg1[%c0_70, %c0_71, %c0_72, %c10] : memref<1x4x4x82xbf16, #tpu.memory_space<vmem>>, vector<1x1x4x72xbf16>
    %62 = vector.shape_cast %61 : vector<1x1x4x72xbf16> to vector<4x72xbf16>
    %c10_73 = arith.constant 10 : index
    %c0_74 = arith.constant 0 : index
    %c0_75 = arith.constant 0 : index
    %63 = vector.load %arg2[%c10_73, %c0_74, %c0_75] : memref<16x8x4xbf16, #tpu.memory_space<vmem>>, vector<1x8x4xbf16>
    %64 = vector.shape_cast %63 : vector<1x8x4xbf16> to vector<8x4xbf16>
    %cst_76 = arith.constant dense<0.000000e+00> : vector<8x72xf32>
    %65 = tpu.matmul %64, %62, %cst_76 {dimension_numbers = #tpu.dot_dimension_numbers<[1], [0], [0], [1], [0, 0, 1, 1], [], []>} : vector<8x4xbf16>, vector<4x72xbf16>, vector<8x72xf32> -> vector<8x72xf32>
    %66 = arith.addf %60, %65 : vector<8x72xf32>
    %c0_77 = arith.constant 0 : index
    %c1_78 = arith.constant 1 : index
    %c0_79 = arith.constant 0 : index
    %c10_80 = arith.constant 10 : index
    %67 = vector.load %arg1[%c0_77, %c1_78, %c0_79, %c10_80] : memref<1x4x4x82xbf16, #tpu.memory_space<vmem>>, vector<1x1x4x72xbf16>
    %68 = vector.shape_cast %67 : vector<1x1x4x72xbf16> to vector<4x72xbf16>
    %c11 = arith.constant 11 : index
    %c0_81 = arith.constant 0 : index
    %c0_82 = arith.constant 0 : index
    %69 = vector.load %arg2[%c11, %c0_81, %c0_82] : memref<16x8x4xbf16, #tpu.memory_space<vmem>>, vector<1x8x4xbf16>
    %70 = vector.shape_cast %69 : vector<1x8x4xbf16> to vector<8x4xbf16>
    %cst_83 = arith.constant dense<0.000000e+00> : vector<8x72xf32>
    %71 = tpu.matmul %70, %68, %cst_83 {dimension_numbers = #tpu.dot_dimension_numbers<[1], [0], [0], [1], [0, 0, 1, 1], [], []>} : vector<8x4xbf16>, vector<4x72xbf16>, vector<8x72xf32> -> vector<8x72xf32>
    %72 = arith.addf %66, %71 : vector<8x72xf32>
    %c0_84 = arith.constant 0 : index
    %c2_85 = arith.constant 2 : index
    %c0_86 = arith.constant 0 : index
    %c9_87 = arith.constant 9 : index
    %73 = vector.load %arg1[%c0_84, %c2_85, %c0_86, %c9_87] : memref<1x4x4x82xbf16, #tpu.memory_space<vmem>>, vector<1x1x4x72xbf16>
    %74 = vector.shape_cast %73 : vector<1x1x4x72xbf16> to vector<4x72xbf16>
    %c12 = arith.constant 12 : index
    %c0_88 = arith.constant 0 : index
    %c0_89 = arith.constant 0 : index
    %75 = vector.load %arg2[%c12, %c0_88, %c0_89] : memref<16x8x4xbf16, #tpu.memory_space<vmem>>, vector<1x8x4xbf16>
    %76 = vector.shape_cast %75 : vector<1x8x4xbf16> to vector<8x4xbf16>
    %cst_90 = arith.constant dense<0.000000e+00> : vector<8x72xf32>
    %77 = tpu.matmul %76, %74, %cst_90 {dimension_numbers = #tpu.dot_dimension_numbers<[1], [0], [0], [1], [0, 0, 1, 1], [], []>} : vector<8x4xbf16>, vector<4x72xbf16>, vector<8x72xf32> -> vector<8x72xf32>
    %78 = arith.addf %72, %77 : vector<8x72xf32>
    %c0_91 = arith.constant 0 : index
    %c3_92 = arith.constant 3 : index
    %c0_93 = arith.constant 0 : index
    %c9_94 = arith.constant 9 : index
    %79 = vector.load %arg1[%c0_91, %c3_92, %c0_93, %c9_94] : memref<1x4x4x82xbf16, #tpu.memory_space<vmem>>, vector<1x1x4x72xbf16>
    %80 = vector.shape_cast %79 : vector<1x1x4x72xbf16> to vector<4x72xbf16>
    %c13 = arith.constant 13 : index
    %c0_95 = arith.constant 0 : index
    %c0_96 = arith.constant 0 : index
    %81 = vector.load %arg2[%c13, %c0_95, %c0_96] : memref<16x8x4xbf16, #tpu.memory_space<vmem>>, vector<1x8x4xbf16>
    %82 = vector.shape_cast %81 : vector<1x8x4xbf16> to vector<8x4xbf16>
    %cst_97 = arith.constant dense<0.000000e+00> : vector<8x72xf32>
    %83 = tpu.matmul %82, %80, %cst_97 {dimension_numbers = #tpu.dot_dimension_numbers<[1], [0], [0], [1], [0, 0, 1, 1], [], []>} : vector<8x4xbf16>, vector<4x72xbf16>, vector<8x72xf32> -> vector<8x72xf32>
    %84 = arith.addf %78, %83 : vector<8x72xf32>
    %c0_98 = arith.constant 0 : index
    %c2_99 = arith.constant 2 : index
    %c0_100 = arith.constant 0 : index
    %c10_101 = arith.constant 10 : index
    %85 = vector.load %arg1[%c0_98, %c2_99, %c0_100, %c10_101] : memref<1x4x4x82xbf16, #tpu.memory_space<vmem>>, vector<1x1x4x72xbf16>
    %86 = vector.shape_cast %85 : vector<1x1x4x72xbf16> to vector<4x72xbf16>
    %c14 = arith.constant 14 : index
    %c0_102 = arith.constant 0 : index
    %c0_103 = arith.constant 0 : index
    %87 = vector.load %arg2[%c14, %c0_102, %c0_103] : memref<16x8x4xbf16, #tpu.memory_space<vmem>>, vector<1x8x4xbf16>
    %88 = vector.shape_cast %87 : vector<1x8x4xbf16> to vector<8x4xbf16>
    %cst_104 = arith.constant dense<0.000000e+00> : vector<8x72xf32>
    %89 = tpu.matmul %88, %86, %cst_104 {dimension_numbers = #tpu.dot_dimension_numbers<[1], [0], [0], [1], [0, 0, 1, 1], [], []>} : vector<8x4xbf16>, vector<4x72xbf16>, vector<8x72xf32> -> vector<8x72xf32>
    %90 = arith.addf %84, %89 : vector<8x72xf32>
    %c0_105 = arith.constant 0 : index
    %c3_106 = arith.constant 3 : index
    %c0_107 = arith.constant 0 : index
    %c10_108 = arith.constant 10 : index
    %91 = vector.load %arg1[%c0_105, %c3_106, %c0_107, %c10_108] : memref<1x4x4x82xbf16, #tpu.memory_space<vmem>>, vector<1x1x4x72xbf16>
    %92 = vector.shape_cast %91 : vector<1x1x4x72xbf16> to vector<4x72xbf16>
    %c15 = arith.constant 15 : index
    %c0_109 = arith.constant 0 : index
    %c0_110 = arith.constant 0 : index
    %93 = vector.load %arg2[%c15, %c0_109, %c0_110] : memref<16x8x4xbf16, #tpu.memory_space<vmem>>, vector<1x8x4xbf16>
    %94 = vector.shape_cast %93 : vector<1x8x4xbf16> to vector<8x4xbf16>
    %cst_111 = arith.constant dense<0.000000e+00> : vector<8x72xf32>
    %95 = tpu.matmul %94, %92, %cst_111 {dimension_numbers = #tpu.dot_dimension_numbers<[1], [0], [0], [1], [0, 0, 1, 1], [], []>} : vector<8x4xbf16>, vector<4x72xbf16>, vector<8x72xf32> -> vector<8x72xf32>
    %96 = arith.addf %90, %95 : vector<8x72xf32>
    %c0_112 = arith.constant 0 : index
    %c0_113 = arith.constant 0 : index
    %97 = vector.load %arg3[%c0_112, %c0_113] : memref<1x72xf32, #tpu.memory_space<vmem>>, vector<1x72xf32>
    %98 = vector.broadcast %97 : vector<1x72xf32> to vector<8x72xf32>
    %99 = arith.mulf %96, %98 : vector<8x72xf32>
    %cst_114 = arith.constant dense<0.000000e+00> : vector<8xf32>
    %100 = vector.multi_reduction <add>, %99, %cst_114 [1] : vector<8x72xf32> to vector<8xf32>
    %101 = vector.shape_cast %100 : vector<8xf32> to vector<8x1xf32>
    %c0_115 = arith.constant 0 : index
    %c0_116 = arith.constant 0 : index
    %c0_117 = arith.constant 0 : index
    %102 = vector.load %arg5[%c0_115, %c0_116, %c0_117] : memref<1x8x1xf32, #tpu.memory_space<vmem>>, vector<1x8x1xf32>
    %103 = vector.shape_cast %102 : vector<1x8x1xf32> to vector<8x1xf32>
    %104 = vector.shape_cast %101 : vector<8x1xf32> to vector<1x8x1xf32>
    tpu.vector_store %arg5[%c0_115, %c0_116, %c0_117], %104 {strides = array<i32>} : memref<1x8x1xf32, #tpu.memory_space<vmem>>, vector<1x8x1xf32>,
    %105 = arith.mulf %99, %99 : vector<8x72xf32>
    %cst_118 = arith.constant dense<0.000000e+00> : vector<8xf32>
    %106 = vector.multi_reduction <add>, %105, %cst_118 [1] : vector<8x72xf32> to vector<8xf32>
    %107 = vector.shape_cast %106 : vector<8xf32> to vector<8x1xf32>
    %c0_119 = arith.constant 0 : index
    %c0_120 = arith.constant 0 : index
    %c0_121 = arith.constant 0 : index
    %108 = vector.load %arg6[%c0_119, %c0_120, %c0_121] : memref<1x8x1xf32, #tpu.memory_space<vmem>>, vector<1x8x1xf32>
    %109 = vector.shape_cast %108 : vector<1x8x1xf32> to vector<8x1xf32>
    %110 = vector.shape_cast %107 : vector<8x1xf32> to vector<1x8x1xf32>
    tpu.vector_store %arg6[%c0_119, %c0_120, %c0_121], %110 {strides = array<i32>} : memref<1x8x1xf32, #tpu.memory_space<vmem>>, vector<1x8x1xf32>,
    %111 = arith.truncf %96 : vector<8x72xf32> to vector<8x72xbf16>
    %c0_122 = arith.constant 0 : index
    %c0_123 = arith.constant 0 : index
    %c0_124 = arith.constant 0 : index
    %112 = vector.load %arg4[%c0_122, %c0_123, %c0_124] : memref<1x8x72xbf16, #tpu.memory_space<vmem>>, vector<1x8x72xbf16>
    %113 = vector.shape_cast %112 : vector<1x8x72xbf16> to vector<8x72xbf16>
    %114 = vector.shape_cast %111 : vector<8x72xbf16> to vector<1x8x72xbf16>
    tpu.vector_store %arg4[%c0_122, %c0_123, %c0_124], %114 {strides = array<i32>} : memref<1x8x72xbf16, #tpu.memory_space<vmem>>, vector<1x8x72xbf16>,
    return
  }
  func.func @transform_0(%arg0: i32) -> (i32, i32, i32, i32) {
    %c0_i32 = arith.constant 0 : i32
    %c0_i32_0 = arith.constant 0 : i32
    %c0_i32_1 = arith.constant 0 : i32
    %c0_i32_2 = arith.constant 0 : i32
    return %arg0, %c0_i32, %c0_i32_0, %c0_i32_1 : i32, i32, i32, i32
  }
  func.func @transform_1(%arg0: i32) -> (i32, i32, i32) {
    %c0_i32 = arith.constant 0 : i32
    %c0_i32_0 = arith.constant 0 : i32
    %c0_i32_1 = arith.constant 0 : i32
    %c0_i32_2 = arith.constant 0 : i32
    return %c0_i32, %c0_i32_0, %c0_i32_1 : i32, i32, i32
  }
  func.func @transform_2(%arg0: i32) -> (i32, i32) {
    %c0_i32 = arith.constant 0 : i32
    %c0_i32_0 = arith.constant 0 : i32
    %c0_i32_1 = arith.constant 0 : i32
    return %c0_i32, %c0_i32_0 : i32, i32
  }
  func.func @transform_3(%arg0: i32) -> (i32, i32, i32) {
    %c0_i32 = arith.constant 0 : i32
    %c0_i32_0 = arith.constant 0 : i32
    %c0_i32_1 = arith.constant 0 : i32
    return %arg0, %c0_i32, %c0_i32_0 : i32, i32, i32
  }
  func.func @transform_4(%arg0: i32) -> (i32, i32, i32) {
    %c0_i32 = arith.constant 0 : i32
    %c0_i32_0 = arith.constant 0 : i32
    %c0_i32_1 = arith.constant 0 : i32
    return %arg0, %c0_i32, %c0_i32_0 : i32, i32, i32
  }
  func.func @transform_5(%arg0: i32) -> (i32, i32, i32) {
    %c0_i32 = arith.constant 0 : i32
    %c0_i32_0 = arith.constant 0 : i32
    %c0_i32_1 = arith.constant 0 : i32
    return %arg0, %c0_i32, %c0_i32_0 : i32, i32, i32
  }
}

</mosaic_0001>

<llo_original>
// kernel: tpu_custom_call.1
$region0: #{tpu_custom_call.1}
  #allocation0 [shape = 'u32[]', space=smem, size = 0x4, offset = 0x4, fixed_abs, tag = 'smem constant byte address 0x4 - core index']
  #allocation1 [shape = 'u32[144,128]{1,0:T(1,128)}', space=vmem, size = 0x12000, scoped, tag = 'internal scratch']
  %s0 = inlined_call_operand.vmem [shape: bf16[2,4,4,82], index: 0, kind: input, shape index: {}]
  %s1 = inlined_call_operand.vmem [shape: bf16[16,8,4], index: 1, kind: input, shape index: {}]
  %s2 = inlined_call_operand.vmem [shape: f32[1,72], index: 2, kind: input, shape index: {}]
  %s3 = inlined_call_operand.hbm [shape: bf16[2,8,72], index: 3, kind: output, shape index: {0}]
  %s4 = inlined_call_operand.vmem [shape: f32[2,8,1], index: 4, kind: output, shape index: {1}]
  %s5 = inlined_call_operand.vmem [shape: f32[2,8,1], index: 5, kind: output, shape index: {2}]
  %6 = xla_tuple %s3, %s4, %s5
  %s7 = sld [smem:[#allocation0]]
  $region61: #{tpu_custom_call.1} parent=0
    _
  %s9 = ssub.s32 1, %s7
  %s10 = scalar_select 0, %s9, %s7
  $region1: #{tpu_custom_call.1} parent=0
    #allocation2 [shape = 'u8[4096]{0}', space=vmem, size = 0x1000, scoped, tag = 'output window, operand 0']
    #allocation3 [shape = 's32[2]{0}', space=sflag, size = 0x8, scoped, tag = 'scoped memory for tpu_custom_call.1']
    %11 = vsyncpa [#allocation3], 0
    %s12 = scalar_lea.sflag [#allocation3], 1
    %13 = vsyncpa %s12, 0
    loop: start=0, step=1, limit=4
    $region2: #{tpu_custom_call.1} parent=1 // loop_pre_header
      _
    $region3: #{tpu_custom_call.1} parent=1 // loop_header
      %s15 = sphi 0, %s19
      %p16 = scmp.ge.s32.totalorder %s15, 4
      %s25 = sphi 0, %s27
      %s28 = sphi 0, %s25
      %s29 = sphi 0, %s28
      %s45 = sphi 0, %s29
      %s49 = sphi 0, %s49
      %s51 = sphi 0, %s49
      %s52 = sphi 0, %s51
      %s66 = sphi 0, %s52
      %s70 = sphi 0, %s70
      %s72 = sphi 0, %s70
      %s73 = sphi 0, %s72
      %s87 = sphi 0, %s73
      %s93 = sphi 0, %s95
      %s96 = sphi 0, %s93
      %s97 = sphi 0, %s96
      %s113 = sphi 0, %s97
      %s119 = sphi 0, %s121
      %s122 = sphi 0, %s119
      %s123 = sphi 0, %s122
      %s139 = sphi 0, %s123
      %s145 = sphi 0, %s147
      %s148 = sphi 0, %s145
      %s149 = sphi 0, %s148
      %s165 = sphi 0, %s149
    $region4: #{tpu_custom_call.1} parent=1 // loop_header_branch
      %18 = sbr.rel (%p16) target = $region8
    $region5: #{tpu_custom_call.1} parent=1 // loop_body
      %s20 = ssub.s32 %s15, 1
      %s21 = ssub.s32 %s15, 2
      %s22 = sadd.s32 %s15, 1
      %s23 = ssub.s32 %s15, %s22
      %p24 = scmp.eq.s32.totalorder %s23, 0
      %s26 = sadd.s32 %s25, 1
      %s27 = scalar_select %p24, %s25, %s26
      %p30 = pneg %p24
      %p31 = scmp.eq.s32.totalorder %s15, 1
      %p32 = por %p30, %p31
      %p33 = scmp.ne.s32.totalorder %s25, %s28
      %p34 = scmp.eq.s32.totalorder %s15, 0
      %p35 = por %p33, %p34
      %p36 = scmp.ne.s32.totalorder %s25, %s28
      %p37 = scmp.eq.s32.totalorder %s20, 1
      %p38 = por %p36, %p37
      %p39 = scmp.ne.s32.totalorder %s28, %s29
      %p40 = scmp.eq.s32.totalorder %s20, 0
      %p41 = por %p39, %p40
      %p42 = scmp.ne.s32.totalorder %s28, %s29
      %p43 = scmp.eq.s32.totalorder %s21, 1
      %p44 = por %p42, %p43
      %p46 = scmp.ne.s32.totalorder %s29, %s45
      %p47 = scmp.eq.s32.totalorder %s21, 0
      %p48 = por %p46, %p47
      %s50 = sadd.s32 %s49, 1
      %p53 = scmp.eq.s32.totalorder %s15, 1
      %p54 = scmp.ne.s32.totalorder %s49, %s51
      %p55 = scmp.eq.s32.totalorder %s15, 0
      %p56 = por %p54, %p55
      %p57 = scmp.ne.s32.totalorder %s49, %s51
      %p58 = scmp.eq.s32.totalorder %s20, 1
      %p59 = por %p57, %p58
      %p60 = scmp.ne.s32.totalorder %s51, %s52
      %p61 = scmp.eq.s32.totalorder %s20, 0
      %p62 = por %p60, %p61
      %p63 = scmp.ne.s32.totalorder %s51, %s52
      %p64 = scmp.eq.s32.totalorder %s21, 1
      %p65 = por %p63, %p64
      %p67 = scmp.ne.s32.totalorder %s52, %s66
      %p68 = scmp.eq.s32.totalorder %s21, 0
      %p69 = por %p67, %p68
      %s71 = sadd.s32 %s70, 1
      %p74 = scmp.eq.s32.totalorder %s15, 1
      %p75 = scmp.ne.s32.totalorder %s70, %s72
      %p76 = scmp.eq.s32.totalorder %s15, 0
      %p77 = por %p75, %p76
      %p78 = scmp.ne.s32.totalorder %s70, %s72
      %p79 = scmp.eq.s32.totalorder %s20, 1
      %p80 = por %p78, %p79
      %p81 = scmp.ne.s32.totalorder %s72, %s73
      %p82 = scmp.eq.s32.totalorder %s20, 0
      %p83 = por %p81, %p82
      %p84 = scmp.ne.s32.totalorder %s72, %s73
      %p85 = scmp.eq.s32.totalorder %s21, 1
      %p86 = por %p84, %p85
      %p88 = scmp.ne.s32.totalorder %s73, %s87
      %p89 = scmp.eq.s32.totalorder %s21, 0
      %p90 = por %p88, %p89
      %s91 = ssub.s32 %s15, %s22
      %p92 = scmp.eq.s32.totalorder %s91, 0
      %s94 = sadd.s32 %s93, 1
      %s95 = scalar_select %p92, %s93, %s94
      %p98 = pneg %p92
      %p99 = scmp.eq.s32.totalorder %s15, 1
      %p100 = por %p98, %p99
      %p101 = scmp.ne.s32.totalorder %s93, %s96
      %p102 = scmp.eq.s32.totalorder %s15, 0
      %p103 = por %p101, %p102
      %p104 = scmp.ne.s32.totalorder %s93, %s96
      %p105 = scmp.eq.s32.totalorder %s20, 1
      %p106 = por %p104, %p105
      %p107 = scmp.ne.s32.totalorder %s96, %s97
      %p108 = scmp.eq.s32.totalorder %s20, 0
      %p109 = por %p107, %p108
      %p110 = scmp.ne.s32.totalorder %s96, %s97
      %p111 = scmp.eq.s32.totalorder %s21, 1
      %p112 = por %p110, %p111
      %p114 = scmp.ne.s32.totalorder %s97, %s113
      %p115 = scmp.eq.s32.totalorder %s21, 0
      %p116 = por %p114, %p115
      %s117 = ssub.s32 %s15, %s22
      %p118 = scmp.eq.s32.totalorder %s117, 0
      %s120 = sadd.s32 %s119, 1
      %s121 = scalar_select %p118, %s119, %s120
      %p124 = pneg %p118
      %p125 = scmp.eq.s32.totalorder %s15, 1
      %p126 = por %p124, %p125
      %p127 = scmp.ne.s32.totalorder %s119, %s122
      %p128 = scmp.eq.s32.totalorder %s15, 0
      %p129 = por %p127, %p128
      %p130 = scmp.ne.s32.totalorder %s119, %s122
      %p131 = scmp.eq.s32.totalorder %s20, 1
      %p132 = por %p130, %p131
      %p133 = scmp.ne.s32.totalorder %s122, %s123
      %p134 = scmp.eq.s32.totalorder %s20, 0
      %p135 = por %p133, %p134
      %p136 = scmp.ne.s32.totalorder %s122, %s123
      %p137 = scmp.eq.s32.totalorder %s21, 1
      %p138 = por %p136, %p137
      %p140 = scmp.ne.s32.totalorder %s123, %s139
      %p141 = scmp.eq.s32.totalorder %s21, 0
      %p142 = por %p140, %p141
      %s143 = ssub.s32 %s15, %s22
      %p144 = scmp.eq.s32.totalorder %s143, 0
      %s146 = sadd.s32 %s145, 1
      %s147 = scalar_select %p144, %s145, %s146
      %p150 = pneg %p144
      %p151 = scmp.eq.s32.totalorder %s15, 1
      %p152 = por %p150, %p151
      %p153 = scmp.ne.s32.totalorder %s145, %s148
      %p154 = scmp.eq.s32.totalorder %s15, 0
      %p155 = por %p153, %p154
      %p156 = scmp.ne.s32.totalorder %s145, %s148
      %p157 = scmp.eq.s32.totalorder %s20, 1
      %p158 = por %p156, %p157
      %p159 = scmp.ne.s32.totalorder %s148, %s149
      %p160 = scmp.eq.s32.totalorder %s20, 0
      %p161 = por %p159, %p160
      %p162 = scmp.ne.s32.totalorder %s148, %s149
      %p163 = scmp.eq.s32.totalorder %s21, 1
      %p164 = por %p162, %p163
      %p166 = scmp.ne.s32.totalorder %s149, %s165
      %p167 = scmp.eq.s32.totalorder %s21, 0
      %p168 = por %p166, %p167
      %p169 = scmp.le.s32.totalorder 1, %s15
      %p170 = scmp.lt.s32.totalorder %s15, 3
      %p171 = pnand %p169, %p170
      %p172 = pneg %p171
      // Predicated region
      $region9: #{tpu_custom_call.1} parent=5 // pred_check
        _
      $region10: #{tpu_custom_call.1} parent=5 // pred_check_branch
        %174 = sbr.rel (%p171) target = $region12
      $region11: #{tpu_custom_call.1} parent=5 // pred_region
        %s175 = ssub.s32 %s15, 1
        // Predicated region
        $region13: #{tpu_custom_call.1} parent=11 // pred_check
          %p176 = pneg %p62
        $region14: #{tpu_custom_call.1} parent=11 // pred_check_branch
          %178 = sbr.rel (%p176) target = $region16
        $region15: #{tpu_custom_call.1} parent=11 // pred_region
          _
        $region16: #{tpu_custom_call.1} parent=11 // pred_fallthru
          _
        // Predicated region
        $region17: #{tpu_custom_call.1} parent=11 // pred_check
          %p179 = pneg %p83
        $region18: #{tpu_custom_call.1} parent=11 // pred_check_branch
          %181 = sbr.rel (%p179) target = $region20
        $region19: #{tpu_custom_call.1} parent=11 // pred_region
          _
        $region20: #{tpu_custom_call.1} parent=11 // pred_fallthru
          _
      $region12: #{tpu_custom_call.1} parent=5 // pred_fallthru
        _
      %p182 = scmp.lt.s32.totalorder %s15, 2
      // Predicated region
      $region21: #{tpu_custom_call.1} parent=5 // pred_check
        %p183 = pneg %p182
      $region22: #{tpu_custom_call.1} parent=5 // pred_check_branch
        %185 = sbr.rel (%p183) target = $region24
      $region23: #{tpu_custom_call.1} parent=5 // pred_region
        // Predicated region
        $region25: #{tpu_custom_call.1} parent=23 // pred_check
          %p186 = pneg %p35
        $region26: #{tpu_custom_call.1} parent=23 // pred_check_branch
          %188 = sbr.rel (%p186) target = $region28
        $region27: #{tpu_custom_call.1} parent=23 // pred_region
          %p189 = scmp.lt.s32.totalorder %s15, 1
          %s190 = scalar_select %p189, %s15, 1
          %s191 = smul.addr %s190, 4
          %s192 = smul.addr %s191, 2
          %s193 = scalar_lea.vmem %s0, %s192
        $region28: #{tpu_custom_call.1} parent=23 // pred_fallthru
          _
      $region24: #{tpu_custom_call.1} parent=5 // pred_fallthru
        _
      %p194 = scmp.le.s32.totalorder 1, %s15
      %p195 = scmp.lt.s32.totalorder %s15, 3
      %p196 = pnand %p194, %p195
      %p197 = pneg %p196
      // Predicated region
      $region29: #{tpu_custom_call.1} parent=5 // pred_check
        _
      $region30: #{tpu_custom_call.1} parent=5 // pred_check_branch
        %199 = sbr.rel (%p196) target = $region32
      $region31: #{tpu_custom_call.1} parent=5 // pred_region
        %s200 = ssub.s32 %s15, 1
        %p201 = scmp.lt.s32.totalorder %s20, 1
        %s202 = scalar_select %p201, %s20, 1
        %s203 = smul.addr %s202, 4
        %s204 = smul.addr %s203, 2
        %s205 = scalar_lea.vmem %s0, %s204
        %p206 = pneg %p41
        %p207 = pneg %p38
        %p208 = pneg %p62
        %p209 = pneg %p59
        %p210 = pneg %p83
        %p211 = pneg %p80
        %p212 = pneg %p109
        %p213 = pneg %p106
        %s214 = sand.u32 %s96, 1
        %s215 = scalar_lea.sflag [#allocation3], %s214
        %s216 = sand.u32 %s96, 1
        %s217 = smul.addr %s216, 4
        %s218 = scalar_lea.vmem [#allocation2], %s217
        %p219 = pneg %p135
        %p220 = pneg %p132
        %p221 = scmp.lt.s32.totalorder %s20, 1
        %s222 = scalar_select %p221, %s20, 1
        %s223 = smul.addr %s222, 8
        %s224 = scalar_lea.vmem %s4, %s223
        %p225 = pneg %p161
        %p226 = pneg %p158
        %p227 = scmp.lt.s32.totalorder %s20, 1
        %s228 = scalar_select %p227, %s20, 1
        %s229 = smul.addr %s228, 8
        %s230 = scalar_lea.vmem %s5, %s229
        %p231 = scmp.lt.s32.totalorder %s20, 1
        %s232 = scalar_select %p231, %s20, 1
        %s233 = smul.addr %s232, 4
        %s234 = smul.addr %s233, 2
        %s235 = scalar_lea.vmem %s0, %s234
        %p236 = scmp.lt.s32.totalorder %s20, 1
        %s237 = scalar_select %p236, %s20, 1
        %s238 = smul.addr %s237, 8
        %s239 = scalar_lea.vmem %s4, %s238
        %p240 = scmp.lt.s32.totalorder %s20, 1
        %s241 = scalar_select %p240, %s20, 1
        %s242 = smul.addr %s241, 8
        %s243 = scalar_lea.vmem %s5, %s242
        %v245 = vld [vmem:[%s235] sm:$0x3]
        %v246 = vld [vmem:[%s1] sm:$0xf]
        %s247 = scalar_lea.vmem %s235, 2
        %v248 = vld [vmem:[%s247] sm:$0x3]
        %s249 = scalar_lea.vmem %s1, 4
        %v250 = vld [vmem:[%s249] sm:$0xf]
        %vm251 = vcmask 31744
        %v253 = vsel %vm251, %v250, 0
        %vm255 = vcmask 1041408
        %v257 = vsel %vm255, %v248, 0
        %259 = vmatprep.subr.bf16.mxu0 0
        %260 = vmatpush1.bf16.msra.mxu0 %v257
        %261 = vmatprep.subr.bf16.mxu0 0
        %262 = vmatpush1.bf16.msra.mxu0 0
        %263 = vmatprep.subr.bf16.mxu0 0
        %264 = vmatpush1.bf16.msra.mxu0 0
        %265 = vmatprep.subr.bf16.mxu0 0
        %266 = vmatpush1.bf16.msra.mxu0 0
        %267 = vmatprep.subr.bf16.mxu0 0
        %268 = vmatpush1.bf16.msra.mxu0 0
        %269 = vmatprep.subr.bf16.mxu0 0
        %270 = vmatpush1.bf16.msra.mxu0 0
        %271 = vmatprep.subr.bf16.mxu0 0
        %272 = vmatpush1.bf16.msra.mxu0 0
        %273 = vmatprep.subr.bf16.mxu0 0
        %274 = vmatpush1.bf16.msra.mxu0 0
        %275 = vmatprep.subr.bf16.mxu0 0
        %276 = vmatpush1.bf16.msra.mxu0 0
        %277 = vmatprep.subr.bf16.mxu0 0
        %278 = vmatpush1.bf16.msra.mxu0 0
        %279 = vmatprep.subr.bf16.mxu0 0
        %280 = vmatpush1.bf16.msra.mxu0 0
        %281 = vmatprep.subr.bf16.mxu0 0
        %282 = vmatpush1.bf16.msra.mxu0 0
        %283 = vmatprep.subr.bf16.mxu0 0
        %284 = vmatpush1.bf16.msra.mxu0 0
        %285 = vmatprep.subr.bf16.mxu0 0
        %286 = vmatpush1.bf16.msra.mxu0 0
        %287 = vmatprep.subr.bf16.mxu0 0
        %288 = vmatpush1.bf16.msra.mxu0 0
        %289 = vmatprep.subr.bf16.mxu0 0
        %290 = vmatpush1.bf16.msra.mxu0 0
        %291 = vmatprep.mubr.bf16.mxu0 0
        %292 = vmatmul.mubr.bf16.gmra.mrb[0].mxu0 %v253
        %v293 = vpop.f32.mrb[0].mxu0
        %v294 = vadd.f32 0.0, %v293
        %v295 = vpop.f32.mrb[0].mxu0
        %v296 = vpop.f32.mrb[0].mxu0
        %v297 = vpop.f32.mrb[0].mxu0
        %298 = vdwg.mxu0
        %v300 = vsel %vm251, %v246, 0
        %v303 = vsel %vm255, %v245, 0
        %305 = vmatprep.subr.bf16.mxu0 0
        %306 = vmatpush1.bf16.msra.mxu0 %v303
        %307 = vmatprep.subr.bf16.mxu0 0
        %308 = vmatpush1.bf16.msra.mxu0 0
        %309 = vmatprep.subr.bf16.mxu0 0
        %310 = vmatpush1.bf16.msra.mxu0 0
        %311 = vmatprep.subr.bf16.mxu0 0
        %312 = vmatpush1.bf16.msra.mxu0 0
        %313 = vmatprep.subr.bf16.mxu0 0
        %314 = vmatpush1.bf16.msra.mxu0 0
        %315 = vmatprep.subr.bf16.mxu0 0
        %316 = vmatpush1.bf16.msra.mxu0 0
        %317 = vmatprep.subr.bf16.mxu0 0
        %318 = vmatpush1.bf16.msra.mxu0 0
        %319 = vmatprep.subr.bf16.mxu0 0
        %320 = vmatpush1.bf16.msra.mxu0 0
        %321 = vmatprep.subr.bf16.mxu0 0
        %322 = vmatpush1.bf16.msra.mxu0 0
        %323 = vmatprep.subr.bf16.mxu0 0
        %324 = vmatpush1.bf16.msra.mxu0 0
        %325 = vmatprep.subr.bf16.mxu0 0
        %326 = vmatpush1.bf16.msra.mxu0 0
        %327 = vmatprep.subr.bf16.mxu0 0
        %328 = vmatpush1.bf16.msra.mxu0 0
        %329 = vmatprep.subr.bf16.mxu0 0
        %330 = vmatpush1.bf16.msra.mxu0 0
        %331 = vmatprep.subr.bf16.mxu0 0
        %332 = vmatpush1.bf16.msra.mxu0 0
        %333 = vmatprep.subr.bf16.mxu0 0
        %334 = vmatpush1.bf16.msra.mxu0 0
        %335 = vmatprep.subr.bf16.mxu0 0
        %336 = vmatpush1.bf16.msra.mxu0 0
        %337 = vmatprep.mubr.bf16.mxu0 0
        %338 = vmatmul.mubr.bf16.gmra.mrb[0].mxu0 %v300
        %v339 = vpop.f32.mrb[0].mxu0
        %v340 = vadd.f32 %v294, %v339
        %v341 = vpop.f32.mrb[0].mxu0
        %v342 = vpop.f32.mrb[0].mxu0
        %v343 = vpop.f32.mrb[0].mxu0
        %344 = vdwg.mxu0
        %s345 = scalar_lea.vmem %s1, 8
        %v346 = vld [vmem:[%s345] sm:$0xf]
        %v349 = vunpack.c.l.s4 1983009808
        %v350 = vunpack.c.0.s8 %v349
        %v351 = vlaneseq
        %v352 = vshrl.u32 %v351, 7
        %v353 = vsub.s32 %v350, %v352
        %v354 = vrot.slane %v245, %v353
        %355 = vrot.lane.b32.xlu0 %v354, 127
        %v356 = vpop.permute.xlu0 %355
        %v358 = vsel %vm251, %v346, 0
        %v361 = vsel %vm255, %v356, 0
        %363 = vmatprep.subr.bf16.mxu0 0
        %364 = vmatpush1.bf16.msra.mxu0 %v361
        %365 = vmatprep.subr.bf16.mxu0 0
        %366 = vmatpush1.bf16.msra.mxu0 0
        %367 = vmatprep.subr.bf16.mxu0 0
        %368 = vmatpush1.bf16.msra.mxu0 0
        %369 = vmatprep.subr.bf16.mxu0 0
        %370 = vmatpush1.bf16.msra.mxu0 0
        %371 = vmatprep.subr.bf16.mxu0 0
        %372 = vmatpush1.bf16.msra.mxu0 0
        %373 = vmatprep.subr.bf16.mxu0 0
        %374 = vmatpush1.bf16.msra.mxu0 0
        %375 = vmatprep.subr.bf16.mxu0 0
        %376 = vmatpush1.bf16.msra.mxu0 0
        %377 = vmatprep.subr.bf16.mxu0 0
        %378 = vmatpush1.bf16.msra.mxu0 0
        %379 = vmatprep.subr.bf16.mxu0 0
        %380 = vmatpush1.bf16.msra.mxu0 0
        %381 = vmatprep.subr.bf16.mxu0 0
        %382 = vmatpush1.bf16.msra.mxu0 0
        %383 = vmatprep.subr.bf16.mxu0 0
        %384 = vmatpush1.bf16.msra.mxu0 0
        %385 = vmatprep.subr.bf16.mxu0 0
        %386 = vmatpush1.bf16.msra.mxu0 0
        %387 = vmatprep.subr.bf16.mxu0 0
        %388 = vmatpush1.bf16.msra.mxu0 0
        %389 = vmatprep.subr.bf16.mxu0 0
        %390 = vmatpush1.bf16.msra.mxu0 0
        %391 = vmatprep.subr.bf16.mxu0 0
        %392 = vmatpush1.bf16.msra.mxu0 0
        %393 = vmatprep.subr.bf16.mxu0 0
        %394 = vmatpush1.bf16.msra.mxu0 0
        %395 = vmatprep.mubr.bf16.mxu0 0
        %396 = vmatmul.mubr.bf16.gmra.mrb[0].mxu0 %v358
        %v397 = vpop.f32.mrb[0].mxu0
        %v398 = vadd.f32 0.0, %v397
        %v399 = vpop.f32.mrb[0].mxu0
        %v400 = vpop.f32.mrb[0].mxu0
        %v401 = vpop.f32.mrb[0].mxu0
        %402 = vdwg.mxu0
        %v403 = vadd.f32 %v340, %v398
        %v404 = vld [vmem:[%s247] sm:$0x3]
        %s405 = scalar_lea.vmem %s1, 12
        %v406 = vld [vmem:[%s405] sm:$0xf]
        %v409 = vunpack.c.l.s4 1983009808
        %v410 = vunpack.c.0.s8 %v409
        %v411 = vlaneseq
        %v412 = vshrl.u32 %v411, 7
        %v413 = vsub.s32 %v410, %v412
        %v414 = vrot.slane %v404, %v413
        %415 = vrot.lane.b32.xlu0 %v414, 127
        %v416 = vpop.permute.xlu0 %415
        %v418 = vsel %vm251, %v406, 0
        %v421 = vsel %vm255, %v416, 0
        %423 = vmatprep.subr.bf16.mxu0 0
        %424 = vmatpush1.bf16.msra.mxu0 %v421
        %425 = vmatprep.subr.bf16.mxu0 0
        %426 = vmatpush1.bf16.msra.mxu0 0
        %427 = vmatprep.subr.bf16.mxu0 0
        %428 = vmatpush1.bf16.msra.mxu0 0
        %429 = vmatprep.subr.bf16.mxu0 0
        %430 = vmatpush1.bf16.msra.mxu0 0
        %431 = vmatprep.subr.bf16.mxu0 0
        %432 = vmatpush1.bf16.msra.mxu0 0
        %433 = vmatprep.subr.bf16.mxu0 0
        %434 = vmatpush1.bf16.msra.mxu0 0
        %435 = vmatprep.subr.bf16.mxu0 0
        %436 = vmatpush1.bf16.msra.mxu0 0
        %437 = vmatprep.subr.bf16.mxu0 0
        %438 = vmatpush1.bf16.msra.mxu0 0
        %439 = vmatprep.subr.bf16.mxu0 0
        %440 = vmatpush1.bf16.msra.mxu0 0
        %441 = vmatprep.subr.bf16.mxu0 0
        %442 = vmatpush1.bf16.msra.mxu0 0
        %443 = vmatprep.subr.bf16.mxu0 0
        %444 = vmatpush1.bf16.msra.mxu0 0
        %445 = vmatprep.subr.bf16.mxu0 0
        %446 = vmatpush1.bf16.msra.mxu0 0
        %447 = vmatprep.subr.bf16.mxu0 0
        %448 = vmatpush1.bf16.msra.mxu0 0
        %449 = vmatprep.subr.bf16.mxu0 0
        %450 = vmatpush1.bf16.msra.mxu0 0
        %451 = vmatprep.subr.bf16.mxu0 0
        %452 = vmatpush1.bf16.msra.mxu0 0
        %453 = vmatprep.subr.bf16.mxu0 0
        %454 = vmatpush1.bf16.msra.mxu0 0
        %455 = vmatprep.mubr.bf16.mxu0 0
        %456 = vmatmul.mubr.bf16.gmra.mrb[0].mxu0 %v418
        %v457 = vpop.f32.mrb[0].mxu0
        %v458 = vadd.f32 0.0, %v457
        %v459 = vpop.f32.mrb[0].mxu0
        %v460 = vpop.f32.mrb[0].mxu0
        %v461 = vpop.f32.mrb[0].mxu0
        %462 = vdwg.mxu0
        %v463 = vadd.f32 %v403, %v458
        %s464 = scalar_lea.vmem %s235, 4
        %v465 = vld [vmem:[%s464] sm:$0x3]
        %s466 = scalar_lea.vmem %s1, 16
        %v467 = vld [vmem:[%s466] sm:$0xf]
        %v469 = vsel %vm251, %v467, 0
        %v472 = vsel %vm255, %v465, 0
        %474 = vmatprep.subr.bf16.mxu0 0
        %475 = vmatpush1.bf16.msra.mxu0 %v472
        %476 = vmatprep.subr.bf16.mxu0 0
        %477 = vmatpush1.bf16.msra.mxu0 0
        %478 = vmatprep.subr.bf16.mxu0 0
        %479 = vmatpush1.bf16.msra.mxu0 0
        %480 = vmatprep.subr.bf16.mxu0 0
        %481 = vmatpush1.bf16.msra.mxu0 0
        %482 = vmatprep.subr.bf16.mxu0 0
        %483 = vmatpush1.bf16.msra.mxu0 0
        %484 = vmatprep.subr.bf16.mxu0 0
        %485 = vmatpush1.bf16.msra.mxu0 0
        %486 = vmatprep.subr.bf16.mxu0 0
        %487 = vmatpush1.bf16.msra.mxu0 0
        %488 = vmatprep.subr.bf16.mxu0 0
        %489 = vmatpush1.bf16.msra.mxu0 0
        %490 = vmatprep.subr.bf16.mxu0 0
        %491 = vmatpush1.bf16.msra.mxu0 0
        %492 = vmatprep.subr.bf16.mxu0 0
        %493 = vmatpush1.bf16.msra.mxu0 0
        %494 = vmatprep.subr.bf16.mxu0 0
        %495 = vmatpush1.bf16.msra.mxu0 0
        %496 = vmatprep.subr.bf16.mxu0 0
        %497 = vmatpush1.bf16.msra.mxu0 0
        %498 = vmatprep.subr.bf16.mxu0 0
        %499 = vmatpush1.bf16.msra.mxu0 0
        %500 = vmatprep.subr.bf16.mxu0 0
        %501 = vmatpush1.bf16.msra.mxu0 0
        %502 = vmatprep.subr.bf16.mxu0 0
        %503 = vmatpush1.bf16.msra.mxu0 0
        %504 = vmatprep.subr.bf16.mxu0 0
        %505 = vmatpush1.bf16.msra.mxu0 0
        %506 = vmatprep.mubr.bf16.mxu0 0
        %507 = vmatmul.mubr.bf16.gmra.mrb[0].mxu0 %v469
        %v508 = vpop.f32.mrb[0].mxu0
        %v509 = vadd.f32 0.0, %v508
        %v510 = vpop.f32.mrb[0].mxu0
        %v511 = vpop.f32.mrb[0].mxu0
        %v512 = vpop.f32.mrb[0].mxu0
        %513 = vdwg.mxu0
        %v514 = vadd.f32 %v463, %v509
        %s515 = scalar_lea.vmem %s235, 6
        %v516 = vld [vmem:[%s515] sm:$0x3]
        %s517 = scalar_lea.vmem %s1, 20
        %v518 = vld [vmem:[%s517] sm:$0xf]
        %v520 = vsel %vm251, %v518, 0
        %v523 = vsel %vm255, %v516, 0
        %525 = vmatprep.subr.bf16.mxu0 0
        %526 = vmatpush1.bf16.msra.mxu0 %v523
        %527 = vmatprep.subr.bf16.mxu0 0
        %528 = vmatpush1.bf16.msra.mxu0 0
        %529 = vmatprep.subr.bf16.mxu0 0
        %530 = vmatpush1.bf16.msra.mxu0 0
        %531 = vmatprep.subr.bf16.mxu0 0
        %532 = vmatpush1.bf16.msra.mxu0 0
        %533 = vmatprep.subr.bf16.mxu0 0
        %534 = vmatpush1.bf16.msra.mxu0 0
        %535 = vmatprep.subr.bf16.mxu0 0
        %536 = vmatpush1.bf16.msra.mxu0 0
        %537 = vmatprep.subr.bf16.mxu0 0
        %538 = vmatpush1.bf16.msra.mxu0 0
        %539 = vmatprep.subr.bf16.mxu0 0
        %540 = vmatpush1.bf16.msra.mxu0 0
        %541 = vmatprep.subr.bf16.mxu0 0
        %542 = vmatpush1.bf16.msra.mxu0 0
        %543 = vmatprep.subr.bf16.mxu0 0
        %544 = vmatpush1.bf16.msra.mxu0 0
        %545 = vmatprep.subr.bf16.mxu0 0
        %546 = vmatpush1.bf16.msra.mxu0 0
        %547 = vmatprep.subr.bf16.mxu0 0
        %548 = vmatpush1.bf16.msra.mxu0 0
        %549 = vmatprep.subr.bf16.mxu0 0
        %550 = vmatpush1.bf16.msra.mxu0 0
        %551 = vmatprep.subr.bf16.mxu0 0
        %552 = vmatpush1.bf16.msra.mxu0 0
        %553 = vmatprep.subr.bf16.mxu0 0
        %554 = vmatpush1.bf16.msra.mxu0 0
        %555 = vmatprep.subr.bf16.mxu0 0
        %556 = vmatpush1.bf16.msra.mxu0 0
        %557 = vmatprep.mubr.bf16.mxu0 0
        %558 = vmatmul.mubr.bf16.gmra.mrb[0].mxu0 %v520
        %v559 = vpop.f32.mrb[0].mxu0
        %v560 = vadd.f32 0.0, %v559
        %v561 = vpop.f32.mrb[0].mxu0
        %v562 = vpop.f32.mrb[0].mxu0
        %v563 = vpop.f32.mrb[0].mxu0
        %564 = vdwg.mxu0
        %v565 = vadd.f32 %v514, %v560
        %s566 = scalar_lea.vmem %s1, 24
        %v567 = vld [vmem:[%s566] sm:$0xf]
        %v570 = vunpack.c.l.s4 1983009808
        %v571 = vunpack.c.0.s8 %v570
        %v572 = vlaneseq
        %v573 = vshrl.u32 %v572, 7
        %v574 = vsub.s32 %v571, %v573
        %v575 = vrot.slane %v465, %v574
        %576 = vrot.lane.b32.xlu0 %v575, 127
        %v577 = vpop.permute.xlu0 %576
        %v579 = vsel %vm251, %v567, 0
        %v582 = vsel %vm255, %v577, 0
        %584 = vmatprep.subr.bf16.mxu0 0
        %585 = vmatpush1.bf16.msra.mxu0 %v582
        %586 = vmatprep.subr.bf16.mxu0 0
        %587 = vmatpush1.bf16.msra.mxu0 0
        %588 = vmatprep.subr.bf16.mxu0 0
        %589 = vmatpush1.bf16.msra.mxu0 0
        %590 = vmatprep.subr.bf16.mxu0 0
        %591 = vmatpush1.bf16.msra.mxu0 0
        %592 = vmatprep.subr.bf16.mxu0 0
        %593 = vmatpush1.bf16.msra.mxu0 0
        %594 = vmatprep.subr.bf16.mxu0 0
        %595 = vmatpush1.bf16.msra.mxu0 0
        %596 = vmatprep.subr.bf16.mxu0 0
        %597 = vmatpush1.bf16.msra.mxu0 0
        %598 = vmatprep.subr.bf16.mxu0 0
        %599 = vmatpush1.bf16.msra.mxu0 0
        %600 = vmatprep.subr.bf16.mxu0 0
        %601 = vmatpush1.bf16.msra.mxu0 0
        %602 = vmatprep.subr.bf16.mxu0 0
        %603 = vmatpush1.bf16.msra.mxu0 0
        %604 = vmatprep.subr.bf16.mxu0 0
        %605 = vmatpush1.bf16.msra.mxu0 0
        %606 = vmatprep.subr.bf16.mxu0 0
        %607 = vmatpush1.bf16.msra.mxu0 0
        %608 = vmatprep.subr.bf16.mxu0 0
        %609 = vmatpush1.bf16.msra.mxu0 0
        %610 = vmatprep.subr.bf16.mxu0 0
        %611 = vmatpush1.bf16.msra.mxu0 0
        %612 = vmatprep.subr.bf16.mxu0 0
        %613 = vmatpush1.bf16.msra.mxu0 0
        %614 = vmatprep.subr.bf16.mxu0 0
        %615 = vmatpush1.bf16.msra.mxu0 0
        %616 = vmatprep.mubr.bf16.mxu0 0
        %617 = vmatmul.mubr.bf16.gmra.mrb[0].mxu0 %v579
        %v618 = vpop.f32.mrb[0].mxu0
        %v619 = vadd.f32 0.0, %v618
        %v620 = vpop.f32.mrb[0].mxu0
        %v621 = vpop.f32.mrb[0].mxu0
        %v622 = vpop.f32.mrb[0].mxu0
        %623 = vdwg.mxu0
        %v624 = vadd.f32 %v565, %v619
        %v625 = vld [vmem:[%s515] sm:$0x3]
        %s626 = scalar_lea.vmem %s1, 28
        %v627 = vld [vmem:[%s626] sm:$0xf]
        %v630 = vunpack.c.l.s4 1983009808
        %v631 = vunpack.c.0.s8 %v630
        %v632 = vlaneseq
        %v633 = vshrl.u32 %v632, 7
        %v634 = vsub.s32 %v631, %v633
        %v635 = vrot.slane %v625, %v634
        %636 = vrot.lane.b32.xlu0 %v635, 127
        %v637 = vpop.permute.xlu0 %636
        %v639 = vsel %vm251, %v627, 0
        %v642 = vsel %vm255, %v637, 0
        %644 = vmatprep.subr.bf16.mxu0 0
        %645 = vmatpush1.bf16.msra.mxu0 %v642
        %646 = vmatprep.subr.bf16.mxu0 0
        %647 = vmatpush1.bf16.msra.mxu0 0
        %648 = vmatprep.subr.bf16.mxu0 0
        %649 = vmatpush1.bf16.msra.mxu0 0
        %650 = vmatprep.subr.bf16.mxu0 0
        %651 = vmatpush1.bf16.msra.mxu0 0
        %652 = vmatprep.subr.bf16.mxu0 0
        %653 = vmatpush1.bf16.msra.mxu0 0
        %654 = vmatprep.subr.bf16.mxu0 0
        %655 = vmatpush1.bf16.msra.mxu0 0
        %656 = vmatprep.subr.bf16.mxu0 0
        %657 = vmatpush1.bf16.msra.mxu0 0
        %658 = vmatprep.subr.bf16.mxu0 0
        %659 = vmatpush1.bf16.msra.mxu0 0
        %660 = vmatprep.subr.bf16.mxu0 0
        %661 = vmatpush1.bf16.msra.mxu0 0
        %662 = vmatprep.subr.bf16.mxu0 0
        %663 = vmatpush1.bf16.msra.mxu0 0
        %664 = vmatprep.subr.bf16.mxu0 0
        %665 = vmatpush1.bf16.msra.mxu0 0
        %666 = vmatprep.subr.bf16.mxu0 0
        %667 = vmatpush1.bf16.msra.mxu0 0
        %668 = vmatprep.subr.bf16.mxu0 0
        %669 = vmatpush1.bf16.msra.mxu0 0
        %670 = vmatprep.subr.bf16.mxu0 0
        %671 = vmatpush1.bf16.msra.mxu0 0
        %672 = vmatprep.subr.bf16.mxu0 0
        %673 = vmatpush1.bf16.msra.mxu0 0
        %674 = vmatprep.subr.bf16.mxu0 0
        %675 = vmatpush1.bf16.msra.mxu0 0
        %676 = vmatprep.mubr.bf16.mxu0 0
        %677 = vmatmul.mubr.bf16.gmra.mrb[0].mxu0 %v639
        %v678 = vpop.f32.mrb[0].mxu0
        %v679 = vadd.f32 0.0, %v678
        %v680 = vpop.f32.mrb[0].mxu0
        %v681 = vpop.f32.mrb[0].mxu0
        %v682 = vpop.f32.mrb[0].mxu0
        %683 = vdwg.mxu0
        %v684 = vadd.f32 %v624, %v679
        %v685 = vld [vmem:[%s235] sm:$0x3]
        %s686 = scalar_lea.vmem %s1, 32
        %v687 = vld [vmem:[%s686] sm:$0xf]
        %v690 = vunpack.c.l.s4 1983009808
        %v691 = vunpack.c.0.s8 %v690
        %v692 = vlaneseq
        %v693 = vshrl.u32 %v692, 7
        %v694 = vsub.s32 %v691, %v693
        %v695 = vrot.slane %v685, %v694
        %696 = vrot.lane.b32.xlu0 %v695, 119
        %v697 = vpop.permute.xlu0 %696
        %v699 = vsel %vm251, %v687, 0
        %v702 = vsel %vm255, %v697, 0
        %704 = vmatprep.subr.bf16.mxu0 0
        %705 = vmatpush1.bf16.msra.mxu0 %v702
        %706 = vmatprep.subr.bf16.mxu0 0
        %707 = vmatpush1.bf16.msra.mxu0 0
        %708 = vmatprep.subr.bf16.mxu0 0
        %709 = vmatpush1.bf16.msra.mxu0 0
        %710 = vmatprep.subr.bf16.mxu0 0
        %711 = vmatpush1.bf16.msra.mxu0 0
        %712 = vmatprep.subr.bf16.mxu0 0
        %713 = vmatpush1.bf16.msra.mxu0 0
        %714 = vmatprep.subr.bf16.mxu0 0
        %715 = vmatpush1.bf16.msra.mxu0 0
        %716 = vmatprep.subr.bf16.mxu0 0
        %717 = vmatpush1.bf16.msra.mxu0 0
        %718 = vmatprep.subr.bf16.mxu0 0
        %719 = vmatpush1.bf16.msra.mxu0 0
        %720 = vmatprep.subr.bf16.mxu0 0
        %721 = vmatpush1.bf16.msra.mxu0 0
        %722 = vmatprep.subr.bf16.mxu0 0
        %723 = vmatpush1.bf16.msra.mxu0 0
        %724 = vmatprep.subr.bf16.mxu0 0
        %725 = vmatpush1.bf16.msra.mxu0 0
        %726 = vmatprep.subr.bf16.mxu0 0
        %727 = vmatpush1.bf16.msra.mxu0 0
        %728 = vmatprep.subr.bf16.mxu0 0
        %729 = vmatpush1.bf16.msra.mxu0 0
        %730 = vmatprep.subr.bf16.mxu0 0
        %731 = vmatpush1.bf16.msra.mxu0 0
        %732 = vmatprep.subr.bf16.mxu0 0
        %733 = vmatpush1.bf16.msra.mxu0 0
        %734 = vmatprep.subr.bf16.mxu0 0
        %735 = vmatpush1.bf16.msra.mxu0 0
        %736 = vmatprep.mubr.bf16.mxu0 0
        %737 = vmatmul.mubr.bf16.gmra.mrb[0].mxu0 %v699
        %v738 = vpop.f32.mrb[0].mxu0
        %v739 = vadd.f32 0.0, %v738
        %v740 = vpop.f32.mrb[0].mxu0
        %v741 = vpop.f32.mrb[0].mxu0
        %v742 = vpop.f32.mrb[0].mxu0
        %743 = vdwg.mxu0
        %v744 = vadd.f32 %v684, %v739
        %v745 = vld [vmem:[%s247] sm:$0x3]
        %s746 = scalar_lea.vmem %s1, 36
        %v747 = vld [vmem:[%s746] sm:$0xf]
        %v750 = vunpack.c.l.s4 1983009808
        %v751 = vunpack.c.0.s8 %v750
        %v752 = vlaneseq
        %v753 = vshrl.u32 %v752, 7
        %v754 = vsub.s32 %v751, %v753
        %v755 = vrot.slane %v745, %v754
        %756 = vrot.lane.b32.xlu0 %v755, 119
        %v757 = vpop.permute.xlu0 %756
        %v759 = vsel %vm251, %v747, 0
        %v762 = vsel %vm255, %v757, 0
        %764 = vmatprep.subr.bf16.mxu0 0
        %765 = vmatpush1.bf16.msra.mxu0 %v762
        %766 = vmatprep.subr.bf16.mxu0 0
        %767 = vmatpush1.bf16.msra.mxu0 0
        %768 = vmatprep.subr.bf16.mxu0 0
        %769 = vmatpush1.bf16.msra.mxu0 0
        %770 = vmatprep.subr.bf16.mxu0 0
        %771 = vmatpush1.bf16.msra.mxu0 0
        %772 = vmatprep.subr.bf16.mxu0 0
        %773 = vmatpush1.bf16.msra.mxu0 0
        %774 = vmatprep.subr.bf16.mxu0 0
        %775 = vmatpush1.bf16.msra.mxu0 0
        %776 = vmatprep.subr.bf16.mxu0 0
        %777 = vmatpush1.bf16.msra.mxu0 0
        %778 = vmatprep.subr.bf16.mxu0 0
        %779 = vmatpush1.bf16.msra.mxu0 0
        %780 = vmatprep.subr.bf16.mxu0 0
        %781 = vmatpush1.bf16.msra.mxu0 0
        %782 = vmatprep.subr.bf16.mxu0 0
        %783 = vmatpush1.bf16.msra.mxu0 0
        %784 = vmatprep.subr.bf16.mxu0 0
        %785 = vmatpush1.bf16.msra.mxu0 0
        %786 = vmatprep.subr.bf16.mxu0 0
        %787 = vmatpush1.bf16.msra.mxu0 0
        %788 = vmatprep.subr.bf16.mxu0 0
        %789 = vmatpush1.bf16.msra.mxu0 0
        %790 = vmatprep.subr.bf16.mxu0 0
        %791 = vmatpush1.bf16.msra.mxu0 0
        %792 = vmatprep.subr.bf16.mxu0 0
        %793 = vmatpush1.bf16.msra.mxu0 0
        %794 = vmatprep.subr.bf16.mxu0 0
        %795 = vmatpush1.bf16.msra.mxu0 0
        %796 = vmatprep.mubr.bf16.mxu0 0
        %797 = vmatmul.mubr.bf16.gmra.mrb[0].mxu0 %v759
        %v798 = vpop.f32.mrb[0].mxu0
        %v799 = vadd.f32 0.0, %v798
        %v800 = vpop.f32.mrb[0].mxu0
        %v801 = vpop.f32.mrb[0].mxu0
        %v802 = vpop.f32.mrb[0].mxu0
        %803 = vdwg.mxu0
        %v804 = vadd.f32 %v744, %v799
        %v805 = vld [vmem:[%s235] sm:$0x3]
        %s806 = scalar_lea.vmem %s1, 40
        %v807 = vld [vmem:[%s806] sm:$0xf]
        %v810 = vunpack.c.l.s4 1983009808
        %v811 = vunpack.c.0.s8 %v810
        %v812 = vlaneseq
        %v813 = vshrl.u32 %v812, 7
        %v814 = vsub.s32 %v811, %v813
        %v815 = vrot.slane %v805, %v814
        %816 = vrot.lane.b32.xlu0 %v815, 118
        %v817 = vpop.permute.xlu0 %816
        %v819 = vsel %vm251, %v807, 0
        %v822 = vsel %vm255, %v817, 0
        %824 = vmatprep.subr.bf16.mxu0 0
        %825 = vmatpush1.bf16.msra.mxu0 %v822
        %826 = vmatprep.subr.bf16.mxu0 0
        %827 = vmatpush1.bf16.msra.mxu0 0
        %828 = vmatprep.subr.bf16.mxu0 0
        %829 = vmatpush1.bf16.msra.mxu0 0
        %830 = vmatprep.subr.bf16.mxu0 0
        %831 = vmatpush1.bf16.msra.mxu0 0
        %832 = vmatprep.subr.bf16.mxu0 0
        %833 = vmatpush1.bf16.msra.mxu0 0
        %834 = vmatprep.subr.bf16.mxu0 0
        %835 = vmatpush1.bf16.msra.mxu0 0
        %836 = vmatprep.subr.bf16.mxu0 0
        %837 = vmatpush1.bf16.msra.mxu0 0
        %838 = vmatprep.subr.bf16.mxu0 0
        %839 = vmatpush1.bf16.msra.mxu0 0
        %840 = vmatprep.subr.bf16.mxu0 0
        %841 = vmatpush1.bf16.msra.mxu0 0
        %842 = vmatprep.subr.bf16.mxu0 0
        %843 = vmatpush1.bf16.msra.mxu0 0
        %844 = vmatprep.subr.bf16.mxu0 0
        %845 = vmatpush1.bf16.msra.mxu0 0
        %846 = vmatprep.subr.bf16.mxu0 0
        %847 = vmatpush1.bf16.msra.mxu0 0
        %848 = vmatprep.subr.bf16.mxu0 0
        %849 = vmatpush1.bf16.msra.mxu0 0
        %850 = vmatprep.subr.bf16.mxu0 0
        %851 = vmatpush1.bf16.msra.mxu0 0
        %852 = vmatprep.subr.bf16.mxu0 0
        %853 = vmatpush1.bf16.msra.mxu0 0
        %854 = vmatprep.subr.bf16.mxu0 0
        %855 = vmatpush1.bf16.msra.mxu0 0
        %856 = vmatprep.mubr.bf16.mxu0 0
        %857 = vmatmul.mubr.bf16.gmra.mrb[0].mxu0 %v819
        %v858 = vpop.f32.mrb[0].mxu0
        %v859 = vadd.f32 0.0, %v858
        %v860 = vpop.f32.mrb[0].mxu0
        %v861 = vpop.f32.mrb[0].mxu0
        %v862 = vpop.f32.mrb[0].mxu0
        %863 = vdwg.mxu0
        %v864 = vadd.f32 %v804, %v859
        %v865 = vld [vmem:[%s247] sm:$0x3]
        %s866 = scalar_lea.vmem %s1, 44
        %v867 = vld [vmem:[%s866] sm:$0xf]
        %v870 = vunpack.c.l.s4 1983009808
        %v871 = vunpack.c.0.s8 %v870
        %v872 = vlaneseq
        %v873 = vshrl.u32 %v872, 7
        %v874 = vsub.s32 %v871, %v873
        %v875 = vrot.slane %v865, %v874
        %876 = vrot.lane.b32.xlu0 %v875, 118
        %v877 = vpop.permute.xlu0 %876
        %v879 = vsel %vm251, %v867, 0
        %v882 = vsel %vm255, %v877, 0
        %884 = vmatprep.subr.bf16.mxu0 0
        %885 = vmatpush1.bf16.msra.mxu0 %v882
        %886 = vmatprep.subr.bf16.mxu0 0
        %887 = vmatpush1.bf16.msra.mxu0 0
        %888 = vmatprep.subr.bf16.mxu0 0
        %889 = vmatpush1.bf16.msra.mxu0 0
        %890 = vmatprep.subr.bf16.mxu0 0
        %891 = vmatpush1.bf16.msra.mxu0 0
        %892 = vmatprep.subr.bf16.mxu0 0
        %893 = vmatpush1.bf16.msra.mxu0 0
        %894 = vmatprep.subr.bf16.mxu0 0
        %895 = vmatpush1.bf16.msra.mxu0 0
        %896 = vmatprep.subr.bf16.mxu0 0
        %897 = vmatpush1.bf16.msra.mxu0 0
        %898 = vmatprep.subr.bf16.mxu0 0
        %899 = vmatpush1.bf16.msra.mxu0 0
        %900 = vmatprep.subr.bf16.mxu0 0
        %901 = vmatpush1.bf16.msra.mxu0 0
        %902 = vmatprep.subr.bf16.mxu0 0
        %903 = vmatpush1.bf16.msra.mxu0 0
        %904 = vmatprep.subr.bf16.mxu0 0
        %905 = vmatpush1.bf16.msra.mxu0 0
        %906 = vmatprep.subr.bf16.mxu0 0
        %907 = vmatpush1.bf16.msra.mxu0 0
        %908 = vmatprep.subr.bf16.mxu0 0
        %909 = vmatpush1.bf16.msra.mxu0 0
        %910 = vmatprep.subr.bf16.mxu0 0
        %911 = vmatpush1.bf16.msra.mxu0 0
        %912 = vmatprep.subr.bf16.mxu0 0
        %913 = vmatpush1.bf16.msra.mxu0 0
        %914 = vmatprep.subr.bf16.mxu0 0
        %915 = vmatpush1.bf16.msra.mxu0 0
        %916 = vmatprep.mubr.bf16.mxu0 0
        %917 = vmatmul.mubr.bf16.gmra.mrb[0].mxu0 %v879
        %v918 = vpop.f32.mrb[0].mxu0
        %v919 = vadd.f32 0.0, %v918
        %v920 = vpop.f32.mrb[0].mxu0
        %v921 = vpop.f32.mrb[0].mxu0
        %v922 = vpop.f32.mrb[0].mxu0
        %923 = vdwg.mxu0
        %v924 = vadd.f32 %v864, %v919
        %v925 = vld [vmem:[%s464] sm:$0x3]
        %s926 = scalar_lea.vmem %s1, 48
        %v927 = vld [vmem:[%s926] sm:$0xf]
        %v930 = vunpack.c.l.s4 1983009808
        %v931 = vunpack.c.0.s8 %v930
        %v932 = vlaneseq
        %v933 = vshrl.u32 %v932, 7
        %v934 = vsub.s32 %v931, %v933
        %v935 = vrot.slane %v925, %v934
        %936 = vrot.lane.b32.xlu0 %v935, 119
        %v937 = vpop.permute.xlu0 %936
        %v939 = vsel %vm251, %v927, 0
        %v942 = vsel %vm255, %v937, 0
        %944 = vmatprep.subr.bf16.mxu0 0
        %945 = vmatpush1.bf16.msra.mxu0 %v942
        %946 = vmatprep.subr.bf16.mxu0 0
        %947 = vmatpush1.bf16.msra.mxu0 0
        %948 = vmatprep.subr.bf16.mxu0 0
        %949 = vmatpush1.bf16.msra.mxu0 0
        %950 = vmatprep.subr.bf16.mxu0 0
        %951 = vmatpush1.bf16.msra.mxu0 0
        %952 = vmatprep.subr.bf16.mxu0 0
        %953 = vmatpush1.bf16.msra.mxu0 0
        %954 = vmatprep.subr.bf16.mxu0 0
        %955 = vmatpush1.bf16.msra.mxu0 0
        %956 = vmatprep.subr.bf16.mxu0 0
        %957 = vmatpush1.bf16.msra.mxu0 0
        %958 = vmatprep.subr.bf16.mxu0 0
        %959 = vmatpush1.bf16.msra.mxu0 0
        %960 = vmatprep.subr.bf16.mxu0 0
        %961 = vmatpush1.bf16.msra.mxu0 0
        %962 = vmatprep.subr.bf16.mxu0 0
        %963 = vmatpush1.bf16.msra.mxu0 0
        %964 = vmatprep.subr.bf16.mxu0 0
        %965 = vmatpush1.bf16.msra.mxu0 0
        %966 = vmatprep.subr.bf16.mxu0 0
        %967 = vmatpush1.bf16.msra.mxu0 0
        %968 = vmatprep.subr.bf16.mxu0 0
        %969 = vmatpush1.bf16.msra.mxu0 0
        %970 = vmatprep.subr.bf16.mxu0 0
        %971 = vmatpush1.bf16.msra.mxu0 0
        %972 = vmatprep.subr.bf16.mxu0 0
        %973 = vmatpush1.bf16.msra.mxu0 0
        %974 = vmatprep.subr.bf16.mxu0 0
        %975 = vmatpush1.bf16.msra.mxu0 0
        %976 = vmatprep.mubr.bf16.mxu0 0
        %977 = vmatmul.mubr.bf16.gmra.mrb[0].mxu0 %v939
        %v978 = vpop.f32.mrb[0].mxu0
        %v979 = vadd.f32 0.0, %v978
        %v980 = vpop.f32.mrb[0].mxu0
        %v981 = vpop.f32.mrb[0].mxu0
        %v982 = vpop.f32.mrb[0].mxu0
        %983 = vdwg.mxu0
        %v984 = vadd.f32 %v924, %v979
        %v985 = vld [vmem:[%s515] sm:$0x3]
        %s986 = scalar_lea.vmem %s1, 52
        %v987 = vld [vmem:[%s986] sm:$0xf]
        %v990 = vunpack.c.l.s4 1983009808
        %v991 = vunpack.c.0.s8 %v990
        %v992 = vlaneseq
        %v993 = vshrl.u32 %v992, 7
        %v994 = vsub.s32 %v991, %v993
        %v995 = vrot.slane %v985, %v994
        %996 = vrot.lane.b32.xlu0 %v995, 119
        %v997 = vpop.permute.xlu0 %996
        %v999 = vsel %vm251, %v987, 0
        %v1002 = vsel %vm255, %v997, 0
        %1004 = vmatprep.subr.bf16.mxu0 0
        %1005 = vmatpush1.bf16.msra.mxu0 %v1002
        %1006 = vmatprep.subr.bf16.mxu0 0
        %1007 = vmatpush1.bf16.msra.mxu0 0
        %1008 = vmatprep.subr.bf16.mxu0 0
        %1009 = vmatpush1.bf16.msra.mxu0 0
        %1010 = vmatprep.subr.bf16.mxu0 0
        %1011 = vmatpush1.bf16.msra.mxu0 0
        %1012 = vmatprep.subr.bf16.mxu0 0
        %1013 = vmatpush1.bf16.msra.mxu0 0
        %1014 = vmatprep.subr.bf16.mxu0 0
        %1015 = vmatpush1.bf16.msra.mxu0 0
        %1016 = vmatprep.subr.bf16.mxu0 0
        %1017 = vmatpush1.bf16.msra.mxu0 0
        %1018 = vmatprep.subr.bf16.mxu0 0
        %1019 = vmatpush1.bf16.msra.mxu0 0
        %1020 = vmatprep.subr.bf16.mxu0 0
        %1021 = vmatpush1.bf16.msra.mxu0 0
        %1022 = vmatprep.subr.bf16.mxu0 0
        %1023 = vmatpush1.bf16.msra.mxu0 0
        %1024 = vmatprep.subr.bf16.mxu0 0
        %1025 = vmatpush1.bf16.msra.mxu0 0
        %1026 = vmatprep.subr.bf16.mxu0 0
        %1027 = vmatpush1.bf16.msra.mxu0 0
        %1028 = vmatprep.subr.bf16.mxu0 0
        %1029 = vmatpush1.bf16.msra.mxu0 0
        %1030 = vmatprep.subr.bf16.mxu0 0
        %1031 = vmatpush1.bf16.msra.mxu0 0
        %1032 = vmatprep.subr.bf16.mxu0 0
        %1033 = vmatpush1.bf16.msra.mxu0 0
        %1034 = vmatprep.subr.bf16.mxu0 0
        %1035 = vmatpush1.bf16.msra.mxu0 0
        %1036 = vmatprep.mubr.bf16.mxu0 0
        %1037 = vmatmul.mubr.bf16.gmra.mrb[0].mxu0 %v999
        %v1038 = vpop.f32.mrb[0].mxu0
        %v1039 = vadd.f32 0.0, %v1038
        %v1040 = vpop.f32.mrb[0].mxu0
        %v1041 = vpop.f32.mrb[0].mxu0
        %v1042 = vpop.f32.mrb[0].mxu0
        %1043 = vdwg.mxu0
        %v1044 = vadd.f32 %v984, %v1039
        %v1045 = vld [vmem:[%s464] sm:$0x3]
        %s1046 = scalar_lea.vmem %s1, 56
        %v1047 = vld [vmem:[%s1046] sm:$0xf]
        %v1050 = vunpack.c.l.s4 1983009808
        %v1051 = vunpack.c.0.s8 %v1050
        %v1052 = vlaneseq
        %v1053 = vshrl.u32 %v1052, 7
        %v1054 = vsub.s32 %v1051, %v1053
        %v1055 = vrot.slane %v1045, %v1054
        %1056 = vrot.lane.b32.xlu0 %v1055, 118
        %v1057 = vpop.permute.xlu0 %1056
        %v1059 = vsel %vm251, %v1047, 0
        %v1062 = vsel %vm255, %v1057, 0
        %1064 = vmatprep.subr.bf16.mxu0 0
        %1065 = vmatpush1.bf16.msra.mxu0 %v1062
        %1066 = vmatprep.subr.bf16.mxu0 0
        %1067 = vmatpush1.bf16.msra.mxu0 0
        %1068 = vmatprep.subr.bf16.mxu0 0
        %1069 = vmatpush1.bf16.msra.mxu0 0
        %1070 = vmatprep.subr.bf16.mxu0 0
        %1071 = vmatpush1.bf16.msra.mxu0 0
        %1072 = vmatprep.subr.bf16.mxu0 0
        %1073 = vmatpush1.bf16.msra.mxu0 0
        %1074 = vmatprep.subr.bf16.mxu0 0
        %1075 = vmatpush1.bf16.msra.mxu0 0
        %1076 = vmatprep.subr.bf16.mxu0 0
        %1077 = vmatpush1.bf16.msra.mxu0 0
        %1078 = vmatprep.subr.bf16.mxu0 0
        %1079 = vmatpush1.bf16.msra.mxu0 0
        %1080 = vmatprep.subr.bf16.mxu0 0
        %1081 = vmatpush1.bf16.msra.mxu0 0
        %1082 = vmatprep.subr.bf16.mxu0 0
        %1083 = vmatpush1.bf16.msra.mxu0 0
        %1084 = vmatprep.subr.bf16.mxu0 0
        %1085 = vmatpush1.bf16.msra.mxu0 0
        %1086 = vmatprep.subr.bf16.mxu0 0
        %1087 = vmatpush1.bf16.msra.mxu0 0
        %1088 = vmatprep.subr.bf16.mxu0 0
        %1089 = vmatpush1.bf16.msra.mxu0 0
        %1090 = vmatprep.subr.bf16.mxu0 0
        %1091 = vmatpush1.bf16.msra.mxu0 0
        %1092 = vmatprep.subr.bf16.mxu0 0
        %1093 = vmatpush1.bf16.msra.mxu0 0
        %1094 = vmatprep.subr.bf16.mxu0 0
        %1095 = vmatpush1.bf16.msra.mxu0 0
        %1096 = vmatprep.mubr.bf16.mxu0 0
        %1097 = vmatmul.mubr.bf16.gmra.mrb[0].mxu0 %v1059
        %v1098 = vpop.f32.mrb[0].mxu0
        %v1099 = vadd.f32 0.0, %v1098
        %v1100 = vpop.f32.mrb[0].mxu0
        %v1101 = vpop.f32.mrb[0].mxu0
        %v1102 = vpop.f32.mrb[0].mxu0
        %1103 = vdwg.mxu0
        %v1104 = vadd.f32 %v1044, %v1099
        %v1105 = vld [vmem:[%s515] sm:$0x3]
        %s1106 = scalar_lea.vmem %s1, 60
        %v1107 = vld [vmem:[%s1106] sm:$0xf]
        %v1110 = vunpack.c.l.s4 1983009808
        %v1111 = vunpack.c.0.s8 %v1110
        %v1112 = vlaneseq
        %v1113 = vshrl.u32 %v1112, 7
        %v1114 = vsub.s32 %v1111, %v1113
        %v1115 = vrot.slane %v1105, %v1114
        %1116 = vrot.lane.b32.xlu0 %v1115, 118
        %v1117 = vpop.permute.xlu0 %1116
        %v1119 = vsel %vm251, %v1107, 0
        %v1122 = vsel %vm255, %v1117, 0
        %1124 = vmatprep.subr.bf16.mxu0 0
        %1125 = vmatpush1.bf16.msra.mxu0 %v1122
        %1126 = vmatprep.subr.bf16.mxu0 0
        %1127 = vmatpush1.bf16.msra.mxu0 0
        %1128 = vmatprep.subr.bf16.mxu0 0
        %1129 = vmatpush1.bf16.msra.mxu0 0
        %1130 = vmatprep.subr.bf16.mxu0 0
        %1131 = vmatpush1.bf16.msra.mxu0 0
        %1132 = vmatprep.subr.bf16.mxu0 0
        %1133 = vmatpush1.bf16.msra.mxu0 0
        %1134 = vmatprep.subr.bf16.mxu0 0
        %1135 = vmatpush1.bf16.msra.mxu0 0
        %1136 = vmatprep.subr.bf16.mxu0 0
        %1137 = vmatpush1.bf16.msra.mxu0 0
        %1138 = vmatprep.subr.bf16.mxu0 0
        %1139 = vmatpush1.bf16.msra.mxu0 0
        %1140 = vmatprep.subr.bf16.mxu0 0
        %1141 = vmatpush1.bf16.msra.mxu0 0
        %1142 = vmatprep.subr.bf16.mxu0 0
        %1143 = vmatpush1.bf16.msra.mxu0 0
        %1144 = vmatprep.subr.bf16.mxu0 0
        %1145 = vmatpush1.bf16.msra.mxu0 0
        %1146 = vmatprep.subr.bf16.mxu0 0
        %1147 = vmatpush1.bf16.msra.mxu0 0
        %1148 = vmatprep.subr.bf16.mxu0 0
        %1149 = vmatpush1.bf16.msra.mxu0 0
        %1150 = vmatprep.subr.bf16.mxu0 0
        %1151 = vmatpush1.bf16.msra.mxu0 0
        %1152 = vmatprep.subr.bf16.mxu0 0
        %1153 = vmatpush1.bf16.msra.mxu0 0
        %1154 = vmatprep.subr.bf16.mxu0 0
        %1155 = vmatpush1.bf16.msra.mxu0 0
        %1156 = vmatprep.mubr.bf16.mxu0 0
        %1157 = vmatmul.mubr.bf16.gmra.mrb[0].mxu0 %v1119
        %v1158 = vpop.f32.mrb[0].mxu0
        %v1159 = vadd.f32 0.0, %v1158
        %v1160 = vpop.f32.mrb[0].mxu0
        %v1161 = vpop.f32.mrb[0].mxu0
        %v1162 = vpop.f32.mrb[0].mxu0
        %1163 = vdwg.mxu0
        %v1164 = vadd.f32 %v1104, %v1159
        %v1165 = vld [vmem:[%s2] sm:$0x1]
        %v1167 = vlaneseq
        %v1168 = vshrl.u32 %v1167, 7
        %v1169 = vsub.s32 0, %v1168
        %v1170 = vrot.slane %v1165, %v1169
        %v1172 = vmul.f32 %v1164, %v1170
        %vm1173 = vcmask 588800
        %v1174 = vsel %vm1173, %v1172, 0.0
        %1175 = vadd.xlane.f32.xlu0 %v1174
        %v1176 = vpop.xlane.xlu0 %1175
        %vm1177 = vcmask 7168
        %1178 = vst.msk [vmem:[%s239] sm:$0xff] %vm1177, %v1176
        %v1179 = vmul.f32 %v1172, %v1172
        %v1180 = vsel %vm1173, %v1179, 0.0
        %1181 = vadd.xlane.f32.xlu0 %v1180
        %v1182 = vpop.xlane.xlu0 %1181
        %1183 = vst.msk [vmem:[%s243] sm:$0xff] %vm1177, %v1182
        %v1184 = vpack.c.bf16 %v1164, %v1164
        %vm1185 = vcmask 584704
        %1186 = vst.msk [vmem:[%s218] sm:$0xf] %vm1185, %v1184
        %s1187 = sand.u32 %s96, 1
        %s1188 = scalar_lea.sflag [#allocation3], %s1187
        %s1189 = sand.u32 %s96, 1
        %s1190 = smul.addr %s1189, 4
        %s1191 = scalar_lea.vmem [#allocation2], %s1190
        %p1192 = scmp.lt.s32.totalorder %s20, 1
        %s1193 = scalar_select %p1192, %s20, 1
        %s1194 = smul.addr %s1193, 8
        %s1195 = scalar_lea.vmem %s4, %s1194
        %p1196 = scmp.lt.s32.totalorder %s20, 1
        %s1197 = scalar_select %p1196, %s20, 1
        %s1198 = smul.addr %s1197, 8
        %s1199 = scalar_lea.vmem %s5, %s1198
        // Predicated region
        $region33: #{tpu_custom_call.1} parent=31 // pred_check
          %p1200 = pneg %p106
        $region34: #{tpu_custom_call.1} parent=31 // pred_check_branch
          %1202 = sbr.rel (%p1200) target = $region36
        $region35: #{tpu_custom_call.1} parent=31 // pred_region
          %s1204 = ssub.s32 64, 64
          %1205 = vsyncadd %s1188, %s1204
          %s1206 = smul.addr %s20, 64
          %s1207 = scalar_lea.hbm %s3, %s1206
          %s1209 = sshll.u32 %s1191, 4
          %s1210 = int_to_ptr.vmem [resolvable:$true] %s1209
          %1212 = dma.vmem_to_hbm [thread:$0]  %s1210, 64, %s1207, %s1188
        $region36: #{tpu_custom_call.1} parent=31 // pred_fallthru
          _
        // Predicated region
        $region37: #{tpu_custom_call.1} parent=31 // pred_check
          %p1213 = pneg %p132
        $region38: #{tpu_custom_call.1} parent=31 // pred_check_branch
          %1215 = sbr.rel (%p1213) target = $region40
        $region39: #{tpu_custom_call.1} parent=31 // pred_region
          _
        $region40: #{tpu_custom_call.1} parent=31 // pred_fallthru
          _
        // Predicated region
        $region41: #{tpu_custom_call.1} parent=31 // pred_check
          %p1216 = pneg %p158
        $region42: #{tpu_custom_call.1} parent=31 // pred_check_branch
          %1218 = sbr.rel (%p1216) target = $region44
        $region43: #{tpu_custom_call.1} parent=31 // pred_region
          _
        $region44: #{tpu_custom_call.1} parent=31 // pred_fallthru
          _
      $region32: #{tpu_custom_call.1} parent=5 // pred_fallthru
        _
      %p1219 = scmp.le.s32.totalorder 2, %s15
      // Predicated region
      $region45: #{tpu_custom_call.1} parent=5 // pred_check
        %p1220 = pneg %p1219
      $region46: #{tpu_custom_call.1} parent=5 // pred_check_branch
        %1222 = sbr.rel (%p1220) target = $region48
      $region47: #{tpu_custom_call.1} parent=5 // pred_region
        %s1223 = ssub.s32 %s15, 2
        // Predicated region
        $region49: #{tpu_custom_call.1} parent=47 // pred_check
          %p1224 = pneg %p112
        $region50: #{tpu_custom_call.1} parent=47 // pred_check_branch
          %1226 = sbr.rel (%p1224) target = $region52
        $region51: #{tpu_custom_call.1} parent=47 // pred_region
          %s1227 = sand.u32 %s97, 1
          %s1228 = scalar_lea.sflag [#allocation3], %s1227
          %s1229 = sand.u32 %s97, 1
          %s1230 = smul.addr %s1229, 4
          %s1231 = scalar_lea.vmem [#allocation2], %s1230
          %1232 = dma.done %s1228, 64
        $region52: #{tpu_custom_call.1} parent=47 // pred_fallthru
          _
        // Predicated region
        $region53: #{tpu_custom_call.1} parent=47 // pred_check
          %p1233 = pneg %p138
        $region54: #{tpu_custom_call.1} parent=47 // pred_check_branch
          %1235 = sbr.rel (%p1233) target = $region56
        $region55: #{tpu_custom_call.1} parent=47 // pred_region
          %p1236 = scmp.lt.s32.totalorder %s21, 1
          %s1237 = scalar_select %p1236, %s21, 1
          %s1238 = smul.addr %s1237, 8
          %s1239 = scalar_lea.vmem %s4, %s1238
        $region56: #{tpu_custom_call.1} parent=47 // pred_fallthru
          _
        // Predicated region
        $region57: #{tpu_custom_call.1} parent=47 // pred_check
          %p1240 = pneg %p164
        $region58: #{tpu_custom_call.1} parent=47 // pred_check_branch
          %1242 = sbr.rel (%p1240) target = $region60
        $region59: #{tpu_custom_call.1} parent=47 // pred_region
          %p1243 = scmp.lt.s32.totalorder %s21, 1
          %s1244 = scalar_select %p1243, %s21, 1
          %s1245 = smul.addr %s1244, 8
          %s1246 = scalar_lea.vmem %s5, %s1245
        $region60: #{tpu_custom_call.1} parent=47 // pred_fallthru
          _
      $region48: #{tpu_custom_call.1} parent=5 // pred_fallthru
        _
    $region6: #{tpu_custom_call.1} parent=1 // loop_footer
      %s19 = sadd.s32 1, %s15
    $region7: #{tpu_custom_call.1} parent=1 // loop_footer_branch
      %14 = sbr.rel target = $region3
    $region8: #{tpu_custom_call.1} parent=1 // loop_exit
      _
    %1247 = vsyncpa [#allocation3], 1
    %s1248 = scalar_lea.sflag [#allocation3], 1
    %1249 = vsyncpa %s1248, 1

</llo_original>
